<compile_context>
chip_gen: v7x
topology: tpu7x:2x2x1
jax: 0.10.0
libtpu: 0.0.40
codegen_flags: <defaults>
</compile_context>

<pallas_src>
import functools

import jax
import jax.numpy as jnp
from jax import lax
from jax.experimental import pallas as pl
from jax.experimental.pallas import tpu as pltpu


def _round_up(x, m):
    return (x + m - 1) // m * m


# ----------------------------- kernel -------------------------------------- #

def _autoencoder_kernel(emb_ref,        # (T*BT, E)  bf16, time-major in-tile
                        w_ih_ref,       # (E, 2H)    bf16, [enc_W_ih | dec_W_ih]
                        enc_b_ref,      # (1, H)     f32
                        enc_w_hh_ref,   # (H, H)     bf16
                        w_enc_ref,      # (H, Z)     bf16
                        w_z2h_ref,      # (Z, H)     bf16
                        dec_b_ref,      # (1, H)     f32
                        dec_w_hh_ref,   # (H, H)     bf16
                        w_out_ref,      # (H, V)     bf16
                        b_out_ref,      # (1, V)     f32
                        logits_ref,     # (T*BT, V)  f32 output
                        hs_ref,         # (T*BT, H)  bf16 VMEM scratch
                        *, seq_len, batch_tile):
    T, B = seq_len, batch_tile
    H = enc_w_hh_ref.shape[0]

    # Hoisted input projections: one big-M matmul feeds both the encoder and
    # the (teacher-forced) decoder input terms for every timestep.
    xp_all = jnp.dot(emb_ref[...], w_ih_ref[...],
                     preferred_element_type=jnp.float32)        # (T*B, 2H) f32
    xp_enc = xp_all[:, :H] + enc_b_ref[...]
    xp_dec = xp_all[:, H:2 * H] + dec_b_ref[...]

    enc_w_hh = enc_w_hh_ref[...]
    dec_w_hh = dec_w_hh_ref[...]

    def rnn_step(xp_t, h_bf, w_hh):
        h = jnp.tanh(xp_t + jnp.dot(h_bf, w_hh,
                                    preferred_element_type=jnp.float32))
        return h.astype(jnp.bfloat16)

    # ---------------- encoder recurrence ----------------
    # h_0 = 0, so step 0 has no hidden-state matmul.
    h_bf = jnp.tanh(xp_enc[:B, :]).astype(jnp.bfloat16)
    if T <= 16:
        for t in range(1, T):
            h_bf = rnn_step(xp_enc[t * B:(t + 1) * B, :], h_bf, enc_w_hh)
    else:
        def enc_body(t, carry):
            xp_t = lax.dynamic_slice_in_dim(xp_enc, t * B, B, axis=0)
            return rnn_step(xp_t, carry, enc_w_hh)
        h_bf = lax.fori_loop(1, T, enc_body, h_bf, unroll=4)

    # ---------------- latent bottleneck ----------------
    # z = h_T @ W_enc ; decoder h0 = tanh(z @ W_z2h)
    z = jnp.dot(h_bf, w_enc_ref[...], preferred_element_type=jnp.float32)
    h0 = jnp.tanh(jnp.dot(z.astype(jnp.bfloat16), w_z2h_ref[...],
                          preferred_element_type=jnp.float32))
    h_bf = h0.astype(jnp.bfloat16)

    # ---------------- decoder recurrence ----------------
    # Hidden states collected into a bf16 VMEM slab so the vocab projection is
    # one batched matmul over all T*B rows.
    if T <= 16:
        for t in range(T):
            h_bf = rnn_step(xp_dec[t * B:(t + 1) * B, :], h_bf, dec_w_hh)
            hs_ref[t * B:(t + 1) * B, :] = h_bf
    else:
        def dec_body(t, carry):
            xp_t = lax.dynamic_slice_in_dim(xp_dec, t * B, B, axis=0)
            new_h = rnn_step(xp_t, carry, dec_w_hh)
            hs_ref[pl.ds(pl.multiple_of(t * B, 8), B), :] = new_h
            return new_h
        lax.fori_loop(0, T, dec_body, h_bf, unroll=4)

    # ---------------- vocab projection (batched, lane-dense store) ----------
    # TODO(synk): tile this over V for realistic vocab sizes (64 MiB VMEM on v7x).
    logits_ref[...] = (
        jnp.dot(hs_ref[...], w_out_ref[...],
                preferred_element_type=jnp.float32)
        + b_out_ref[...])


# ----------------------------- wrapper -------------------------------------- #

def _fused_forward(emb_flat, w_ih_all, enc_b, enc_w_hh, w_enc, w_z2h,
                   dec_b, dec_w_hh, w_out, b_out, *, seq_len, batch_tile,
                   num_tiles):
    E = emb_flat.shape[1]
    H = enc_w_hh.shape[0]
    Z = w_enc.shape[1]
    V = w_out.shape[1]
    rows = seq_len * batch_tile
    kernel = functools.partial(_autoencoder_kernel,
                               seq_len=seq_len, batch_tile=batch_tile)

    def wspec(shape):
        # Grid-invariant weights/biases: fetched once, single-buffered.
        return pl.BlockSpec(shape, lambda i: (0, 0),
                            pipeline_mode=pl.Buffered(1))

    return pl.pallas_call(
        kernel,
        out_shape=jax.ShapeDtypeStruct((num_tiles * rows, V), jnp.float32),
        grid=(num_tiles,),
        in_specs=[
            pl.BlockSpec((rows, E), lambda i: (i, 0)),   # embeddings, per tile
            wspec((E, 2 * H)),                           # fused enc/dec W_ih
            wspec((1, H)),                               # enc bias
            wspec((H, H)),                               # enc W_hh
            wspec((H, Z)),                               # W_enc (to latent)
            wspec((Z, H)),                               # W_z2h (to dec h0)
            wspec((1, H)),                               # dec bias
            wspec((H, H)),                               # dec W_hh
            wspec((H, V)),                               # W_out
            wspec((1, V)),                               # b_out
        ],
        out_specs=pl.BlockSpec((rows, V), lambda i: (i, 0)),
        scratch_shapes=[pltpu.VMEM((rows, H), jnp.bfloat16)],
        compiler_params=pltpu.CompilerParams(
            dimension_semantics=("parallel",)),
    )(emb_flat, w_ih_all, enc_b, enc_w_hh, w_enc, w_z2h, dec_b, dec_w_hh,
      w_out, b_out)


def init_params(key, vocab_size, embed_size, hidden_size, enc_out_size,
                pad_idx=0):
    ks = jax.random.split(key, 8)
    s = 0.1

    def w(k, shape):
        return (s * jax.random.normal(k, shape, jnp.float32)
                ).astype(jnp.bfloat16)

    emb = w(ks[0], (vocab_size, embed_size))
    emb = emb.at[pad_idx].set(0)                  # padding_idx row is zero
    # Encoder/decoder input projections fused along N at init time so the
    # jitted forward does not re-concatenate per call.
    w_ih_all = jnp.concatenate(
        [w(ks[1], (embed_size, hidden_size)),     # encoder W_ih
         w(ks[5], (embed_size, hidden_size))],    # decoder W_ih
        axis=1)
    return {
        "embedding": emb,
        "w_ih_all": w_ih_all,
        "enc_w_hh": w(ks[2], (hidden_size, hidden_size)),
        "enc_b":    jnp.zeros((1, hidden_size), jnp.float32),
        "w_enc":    w(ks[3], (hidden_size, enc_out_size)),
        "w_z2h":    w(ks[4], (enc_out_size, hidden_size)),
        "dec_w_hh": w(ks[6], (hidden_size, hidden_size)),
        "dec_b":    jnp.zeros((1, hidden_size), jnp.float32),
        "w_out":    w(ks[7], (hidden_size, vocab_size)),
        "b_out":    jnp.zeros((1, vocab_size), jnp.float32),
    }


@functools.partial(jax.jit, static_argnames=("batch_tile",))
def autoencoder_rnn_forward(params, token_ids, batch_tile=128):
    """token_ids: [B, T] int32 -> reconstruction logits [B, T, V] (f32)."""
    B, T = token_ids.shape
    E = params["embedding"].shape[1]
    V = params["w_out"].shape[1]

    # Pad batch to a sublane-friendly tile (multiple of 16 for the bf16 hidden
    # slab); padded rows use token 0 and are dropped from the output.
    bt = _round_up(min(batch_tile, _round_up(B, 16)), 16)
    b_pad = _round_up(B, bt)
    nbt = b_pad // bt
    ids = token_ids
    if b_pad != B:
        ids = jnp.pad(token_ids, ((0, b_pad - B), (0, 0)))

    # Embedding gather (pad row already zero), laid out so each batch tile is
    # a contiguous, time-major slab of rows — the layout the recurrence wants.
    # TODO(synk): at production vocab/seq sizes fold this gather into the
    #             kernel via PrefetchScalarGridSpec + pl.Element row gather.
    emb = params["embedding"][ids]                           # (b_pad, T, E) bf16
    emb_flat = (emb.reshape(nbt, bt, T, E)
                   .transpose(0, 2, 1, 3)
                   .reshape(nbt * T * bt, E))

    logits_flat = _fused_forward(
        emb_flat, params["w_ih_all"], params["enc_b"], params["enc_w_hh"],
        params["w_enc"], params["w_z2h"], params["dec_b"], params["dec_w_hh"],
        params["w_out"], params["b_out"],
        seq_len=T, batch_tile=bt, num_tiles=nbt)             # (nbt*T*bt, V)

    # tile/time-major -> batch-first; negligible at these shapes.
    # TODO(synk): at V >= 32k emit batch-major from the kernel (reorder the
    #             H-wide hidden slab in VMEM) instead of transposing the
    #             V-wide logits in HBM.
    logits = (logits_flat.reshape(nbt, T, bt, V)
                          .transpose(0, 2, 1, 3)
                          .reshape(b_pad, T, V))
    return logits[:B]


if __name__ == "__main__":
    # Small shapes consistent with the module's hyperparameters.
    B, T = 24, 8                      # batch (non-multiple of 16 -> exercises pad), seq
    V, E, H, Z = 256, 128, 128, 128   # vocab, embed, hidden, enc_out
    PAD = 0

    key = jax.random.PRNGKey(0)
    k_par, k_tok = jax.random.split(key)

    params = init_params(k_par, V, E, H, Z, pad_idx=PAD)
    token_ids = jax.random.randint(k_tok, (B, T), 0, V, dtype=jnp.int32)
    # force a few pad tokens so the padding_idx path is exercised
    token_ids = token_ids.at[:, -1].set(PAD)

    # batch_tile=16 exercises the parallel batch-tile grid (2 tiles) at demo
    # shapes; the production default of 128 keeps the per-step recurrence
    # matmul at MXU height before adding grid steps.
    logits = autoencoder_rnn_forward(params, token_ids, batch_tile=16)
    jax.block_until_ready(logits)

    assert logits.shape == (B, T, V), logits.shape
    assert logits.dtype == jnp.float32
    assert bool(jnp.all(jnp.isfinite(logits)))
    print("KERNEL_OK")
</pallas_src>

<mosaic_0001>
module attributes {stable_mosaic.version = 11 : i64} {
  func.func @_autoencoder_kernel(%arg0: i32, %arg1: memref<128x128xbf16, #tpu.memory_space<vmem>>, %arg2: memref<128x256xbf16, #tpu.memory_space<vmem>>, %arg3: memref<1x128xf32, #tpu.memory_space<vmem>>, %arg4: memref<128x128xbf16, #tpu.memory_space<vmem>>, %arg5: memref<128x128xbf16, #tpu.memory_space<vmem>>, %arg6: memref<128x128xbf16, #tpu.memory_space<vmem>>, %arg7: memref<1x128xf32, #tpu.memory_space<vmem>>, %arg8: memref<128x128xbf16, #tpu.memory_space<vmem>>, %arg9: memref<128x256xbf16, #tpu.memory_space<vmem>>, %arg10: memref<1x256xf32, #tpu.memory_space<vmem>>, %arg11: memref<128x256xf32, #tpu.memory_space<vmem>>, %arg12: memref<128x128xbf16, #tpu.memory_space<vmem>>) attributes {dimension_semantics = [#tpu.dimension_semantics<parallel>], iteration_bounds = array<i64: 2>, scalar_prefetch = 0 : i64, scratch_operands = 1 : i64, tpu.core_type = #tpu.core_type<tc>, window_params = [{transform_indices = @transform_0, window_bounds = array<i64: 128, 128>}, {pipeline_mode = #tpu.pipeline_mode<synchronous>, transform_indices = @transform_1, window_bounds = array<i64: 128, 256>}, {pipeline_mode = #tpu.pipeline_mode<synchronous>, transform_indices = @transform_2, window_bounds = array<i64: 1, 128>}, {pipeline_mode = #tpu.pipeline_mode<synchronous>, transform_indices = @transform_3, window_bounds = array<i64: 128, 128>}, {pipeline_mode = #tpu.pipeline_mode<synchronous>, transform_indices = @transform_4, window_bounds = array<i64: 128, 128>}, {pipeline_mode = #tpu.pipeline_mode<synchronous>, transform_indices = @transform_5, window_bounds = array<i64: 128, 128>}, {pipeline_mode = #tpu.pipeline_mode<synchronous>, transform_indices = @transform_6, window_bounds = array<i64: 1, 128>}, {pipeline_mode = #tpu.pipeline_mode<synchronous>, transform_indices = @transform_7, window_bounds = array<i64: 128, 128>}, {pipeline_mode = #tpu.pipeline_mode<synchronous>, transform_indices = @transform_8, window_bounds = array<i64: 128, 256>}, {pipeline_mode = #tpu.pipeline_mode<synchronous>, transform_indices = @transform_9, window_bounds = array<i64: 1, 256>}, {transform_indices = @transform_10, window_bounds = array<i64: 128, 256>}]} {
    %c0 = arith.constant 0 : index
    %c0_0 = arith.constant 0 : index
    %0 = vector.load %arg1[%c0, %c0_0] : memref<128x128xbf16, #tpu.memory_space<vmem>>, vector<128x128xbf16>
    %c0_1 = arith.constant 0 : index
    %c0_2 = arith.constant 0 : index
    %1 = vector.load %arg2[%c0_1, %c0_2] : memref<128x256xbf16, #tpu.memory_space<vmem>>, vector<128x256xbf16>
    %cst = arith.constant dense<0.000000e+00> : vector<128x256xf32>
    %2 = tpu.matmul %0, %1, %cst {dimension_numbers = #tpu.dot_dimension_numbers<[1], [0], [0], [1], [0, 0, 1, 1], [], []>} : vector<128x128xbf16>, vector<128x256xbf16>, vector<128x256xf32> -> vector<128x256xf32>
    %3 = vector.extract_strided_slice %2 {offsets = [0, 0], sizes = [128, 128], strides = [1, 1]} : vector<128x256xf32> to vector<128x128xf32>
    %c0_3 = arith.constant 0 : index
    %c0_4 = arith.constant 0 : index
    %4 = vector.load %arg3[%c0_3, %c0_4] : memref<1x128xf32, #tpu.memory_space<vmem>>, vector<1x128xf32>
    %5 = vector.broadcast %4 : vector<1x128xf32> to vector<128x128xf32>
    %6 = arith.addf %3, %5 : vector<128x128xf32>
    %7 = vector.extract_strided_slice %2 {offsets = [0, 128], sizes = [128, 128], strides = [1, 1]} : vector<128x256xf32> to vector<128x128xf32>
    %c0_5 = arith.constant 0 : index
    %c0_6 = arith.constant 0 : index
    %8 = vector.load %arg7[%c0_5, %c0_6] : memref<1x128xf32, #tpu.memory_space<vmem>>, vector<1x128xf32>
    %9 = vector.broadcast %8 : vector<1x128xf32> to vector<128x128xf32>
    %10 = arith.addf %7, %9 : vector<128x128xf32>
    %c0_7 = arith.constant 0 : index
    %c0_8 = arith.constant 0 : index
    %11 = vector.load %arg4[%c0_7, %c0_8] : memref<128x128xbf16, #tpu.memory_space<vmem>>, vector<128x128xbf16>
    %c0_9 = arith.constant 0 : index
    %c0_10 = arith.constant 0 : index
    %12 = vector.load %arg8[%c0_9, %c0_10] : memref<128x128xbf16, #tpu.memory_space<vmem>>, vector<128x128xbf16>
    %13 = vector.extract_strided_slice %6 {offsets = [0, 0], sizes = [16, 128], strides = [1, 1]} : vector<128x128xf32> to vector<16x128xf32>
    %14 = math.tanh %13 : vector<16x128xf32>
    %15 = arith.truncf %14 : vector<16x128xf32> to vector<16x128xbf16>
    %16 = vector.extract_strided_slice %6 {offsets = [16, 0], sizes = [16, 128], strides = [1, 1]} : vector<128x128xf32> to vector<16x128xf32>
    %cst_11 = arith.constant dense<0.000000e+00> : vector<16x128xf32>
    %17 = tpu.matmul %15, %11, %cst_11 {dimension_numbers = #tpu.dot_dimension_numbers<[1], [0], [0], [1], [0, 0, 1, 1], [], []>} : vector<16x128xbf16>, vector<128x128xbf16>, vector<16x128xf32> -> vector<16x128xf32>
    %18 = arith.addf %16, %17 : vector<16x128xf32>
    %19 = math.tanh %18 : vector<16x128xf32>
    %20 = arith.truncf %19 : vector<16x128xf32> to vector<16x128xbf16>
    %21 = vector.extract_strided_slice %6 {offsets = [32, 0], sizes = [16, 128], strides = [1, 1]} : vector<128x128xf32> to vector<16x128xf32>
    %cst_12 = arith.constant dense<0.000000e+00> : vector<16x128xf32>
    %22 = tpu.matmul %20, %11, %cst_12 {dimension_numbers = #tpu.dot_dimension_numbers<[1], [0], [0], [1], [0, 0, 1, 1], [], []>} : vector<16x128xbf16>, vector<128x128xbf16>, vector<16x128xf32> -> vector<16x128xf32>
    %23 = arith.addf %21, %22 : vector<16x128xf32>
    %24 = math.tanh %23 : vector<16x128xf32>
    %25 = arith.truncf %24 : vector<16x128xf32> to vector<16x128xbf16>
    %26 = vector.extract_strided_slice %6 {offsets = [48, 0], sizes = [16, 128], strides = [1, 1]} : vector<128x128xf32> to vector<16x128xf32>
    %cst_13 = arith.constant dense<0.000000e+00> : vector<16x128xf32>
    %27 = tpu.matmul %25, %11, %cst_13 {dimension_numbers = #tpu.dot_dimension_numbers<[1], [0], [0], [1], [0, 0, 1, 1], [], []>} : vector<16x128xbf16>, vector<128x128xbf16>, vector<16x128xf32> -> vector<16x128xf32>
    %28 = arith.addf %26, %27 : vector<16x128xf32>
    %29 = math.tanh %28 : vector<16x128xf32>
    %30 = arith.truncf %29 : vector<16x128xf32> to vector<16x128xbf16>
    %31 = vector.extract_strided_slice %6 {offsets = [64, 0], sizes = [16, 128], strides = [1, 1]} : vector<128x128xf32> to vector<16x128xf32>
    %cst_14 = arith.constant dense<0.000000e+00> : vector<16x128xf32>
    %32 = tpu.matmul %30, %11, %cst_14 {dimension_numbers = #tpu.dot_dimension_numbers<[1], [0], [0], [1], [0, 0, 1, 1], [], []>} : vector<16x128xbf16>, vector<128x128xbf16>, vector<16x128xf32> -> vector<16x128xf32>
    %33 = arith.addf %31, %32 : vector<16x128xf32>
    %34 = math.tanh %33 : vector<16x128xf32>
    %35 = arith.truncf %34 : vector<16x128xf32> to vector<16x128xbf16>
    %36 = vector.extract_strided_slice %6 {offsets = [80, 0], sizes = [16, 128], strides = [1, 1]} : vector<128x128xf32> to vector<16x128xf32>
    %cst_15 = arith.constant dense<0.000000e+00> : vector<16x128xf32>
    %37 = tpu.matmul %35, %11, %cst_15 {dimension_numbers = #tpu.dot_dimension_numbers<[1], [0], [0], [1], [0, 0, 1, 1], [], []>} : vector<16x128xbf16>, vector<128x128xbf16>, vector<16x128xf32> -> vector<16x128xf32>
    %38 = arith.addf %36, %37 : vector<16x128xf32>
    %39 = math.tanh %38 : vector<16x128xf32>
    %40 = arith.truncf %39 : vector<16x128xf32> to vector<16x128xbf16>
    %41 = vector.extract_strided_slice %6 {offsets = [96, 0], sizes = [16, 128], strides = [1, 1]} : vector<128x128xf32> to vector<16x128xf32>
    %cst_16 = arith.constant dense<0.000000e+00> : vector<16x128xf32>
    %42 = tpu.matmul %40, %11, %cst_16 {dimension_numbers = #tpu.dot_dimension_numbers<[1], [0], [0], [1], [0, 0, 1, 1], [], []>} : vector<16x128xbf16>, vector<128x128xbf16>, vector<16x128xf32> -> vector<16x128xf32>
    %43 = arith.addf %41, %42 : vector<16x128xf32>
    %44 = math.tanh %43 : vector<16x128xf32>
    %45 = arith.truncf %44 : vector<16x128xf32> to vector<16x128xbf16>
    %46 = vector.extract_strided_slice %6 {offsets = [112, 0], sizes = [16, 128], strides = [1, 1]} : vector<128x128xf32> to vector<16x128xf32>
    %cst_17 = arith.constant dense<0.000000e+00> : vector<16x128xf32>
    %47 = tpu.matmul %45, %11, %cst_17 {dimension_numbers = #tpu.dot_dimension_numbers<[1], [0], [0], [1], [0, 0, 1, 1], [], []>} : vector<16x128xbf16>, vector<128x128xbf16>, vector<16x128xf32> -> vector<16x128xf32>
    %48 = arith.addf %46, %47 : vector<16x128xf32>
    %49 = math.tanh %48 : vector<16x128xf32>
    %50 = arith.truncf %49 : vector<16x128xf32> to vector<16x128xbf16>
    %c0_18 = arith.constant 0 : index
    %c0_19 = arith.constant 0 : index
    %51 = vector.load %arg5[%c0_18, %c0_19] : memref<128x128xbf16, #tpu.memory_space<vmem>>, vector<128x128xbf16>
    %cst_20 = arith.constant dense<0.000000e+00> : vector<16x128xf32>
    %52 = tpu.matmul %50, %51, %cst_20 {dimension_numbers = #tpu.dot_dimension_numbers<[1], [0], [0], [1], [0, 0, 1, 1], [], []>} : vector<16x128xbf16>, vector<128x128xbf16>, vector<16x128xf32> -> vector<16x128xf32>
    %53 = arith.truncf %52 : vector<16x128xf32> to vector<16x128xbf16>
    %c0_21 = arith.constant 0 : index
    %c0_22 = arith.constant 0 : index
    %54 = vector.load %arg6[%c0_21, %c0_22] : memref<128x128xbf16, #tpu.memory_space<vmem>>, vector<128x128xbf16>
    %cst_23 = arith.constant dense<0.000000e+00> : vector<16x128xf32>
    %55 = tpu.matmul %53, %54, %cst_23 {dimension_numbers = #tpu.dot_dimension_numbers<[1], [0], [0], [1], [0, 0, 1, 1], [], []>} : vector<16x128xbf16>, vector<128x128xbf16>, vector<16x128xf32> -> vector<16x128xf32>
    %56 = math.tanh %55 : vector<16x128xf32>
    %57 = arith.truncf %56 : vector<16x128xf32> to vector<16x128xbf16>
    %58 = vector.extract_strided_slice %10 {offsets = [0, 0], sizes = [16, 128], strides = [1, 1]} : vector<128x128xf32> to vector<16x128xf32>
    %cst_24 = arith.constant dense<0.000000e+00> : vector<16x128xf32>
    %59 = tpu.matmul %57, %12, %cst_24 {dimension_numbers = #tpu.dot_dimension_numbers<[1], [0], [0], [1], [0, 0, 1, 1], [], []>} : vector<16x128xbf16>, vector<128x128xbf16>, vector<16x128xf32> -> vector<16x128xf32>
    %60 = arith.addf %58, %59 : vector<16x128xf32>
    %61 = math.tanh %60 : vector<16x128xf32>
    %62 = arith.truncf %61 : vector<16x128xf32> to vector<16x128xbf16>
    %c0_25 = arith.constant 0 : index
    %c0_26 = arith.constant 0 : index
    %63 = vector.load %arg12[%c0_25, %c0_26] : memref<128x128xbf16, #tpu.memory_space<vmem>>, vector<16x128xbf16>
    tpu.vector_store %arg12[%c0_25, %c0_26], %62 {strides = array<i32>} : memref<128x128xbf16, #tpu.memory_space<vmem>>, vector<16x128xbf16>,
    %64 = vector.extract_strided_slice %10 {offsets = [16, 0], sizes = [16, 128], strides = [1, 1]} : vector<128x128xf32> to vector<16x128xf32>
    %cst_27 = arith.constant dense<0.000000e+00> : vector<16x128xf32>
    %65 = tpu.matmul %62, %12, %cst_27 {dimension_numbers = #tpu.dot_dimension_numbers<[1], [0], [0], [1], [0, 0, 1, 1], [], []>} : vector<16x128xbf16>, vector<128x128xbf16>, vector<16x128xf32> -> vector<16x128xf32>
    %66 = arith.addf %64, %65 : vector<16x128xf32>
    %67 = math.tanh %66 : vector<16x128xf32>
    %68 = arith.truncf %67 : vector<16x128xf32> to vector<16x128xbf16>
    %c16 = arith.constant 16 : index
    %c0_28 = arith.constant 0 : index
    %69 = vector.load %arg12[%c16, %c0_28] : memref<128x128xbf16, #tpu.memory_space<vmem>>, vector<16x128xbf16>
    tpu.vector_store %arg12[%c16, %c0_28], %68 {strides = array<i32>} : memref<128x128xbf16, #tpu.memory_space<vmem>>, vector<16x128xbf16>,
    %70 = vector.extract_strided_slice %10 {offsets = [32, 0], sizes = [16, 128], strides = [1, 1]} : vector<128x128xf32> to vector<16x128xf32>
    %cst_29 = arith.constant dense<0.000000e+00> : vector<16x128xf32>
    %71 = tpu.matmul %68, %12, %cst_29 {dimension_numbers = #tpu.dot_dimension_numbers<[1], [0], [0], [1], [0, 0, 1, 1], [], []>} : vector<16x128xbf16>, vector<128x128xbf16>, vector<16x128xf32> -> vector<16x128xf32>
    %72 = arith.addf %70, %71 : vector<16x128xf32>
    %73 = math.tanh %72 : vector<16x128xf32>
    %74 = arith.truncf %73 : vector<16x128xf32> to vector<16x128xbf16>
    %c32 = arith.constant 32 : index
    %c0_30 = arith.constant 0 : index
    %75 = vector.load %arg12[%c32, %c0_30] : memref<128x128xbf16, #tpu.memory_space<vmem>>, vector<16x128xbf16>
    tpu.vector_store %arg12[%c32, %c0_30], %74 {strides = array<i32>} : memref<128x128xbf16, #tpu.memory_space<vmem>>, vector<16x128xbf16>,
    %76 = vector.extract_strided_slice %10 {offsets = [48, 0], sizes = [16, 128], strides = [1, 1]} : vector<128x128xf32> to vector<16x128xf32>
    %cst_31 = arith.constant dense<0.000000e+00> : vector<16x128xf32>
    %77 = tpu.matmul %74, %12, %cst_31 {dimension_numbers = #tpu.dot_dimension_numbers<[1], [0], [0], [1], [0, 0, 1, 1], [], []>} : vector<16x128xbf16>, vector<128x128xbf16>, vector<16x128xf32> -> vector<16x128xf32>
    %78 = arith.addf %76, %77 : vector<16x128xf32>
    %79 = math.tanh %78 : vector<16x128xf32>
    %80 = arith.truncf %79 : vector<16x128xf32> to vector<16x128xbf16>
    %c48 = arith.constant 48 : index
    %c0_32 = arith.constant 0 : index
    %81 = vector.load %arg12[%c48, %c0_32] : memref<128x128xbf16, #tpu.memory_space<vmem>>, vector<16x128xbf16>
    tpu.vector_store %arg12[%c48, %c0_32], %80 {strides = array<i32>} : memref<128x128xbf16, #tpu.memory_space<vmem>>, vector<16x128xbf16>,
    %82 = vector.extract_strided_slice %10 {offsets = [64, 0], sizes = [16, 128], strides = [1, 1]} : vector<128x128xf32> to vector<16x128xf32>
    %cst_33 = arith.constant dense<0.000000e+00> : vector<16x128xf32>
    %83 = tpu.matmul %80, %12, %cst_33 {dimension_numbers = #tpu.dot_dimension_numbers<[1], [0], [0], [1], [0, 0, 1, 1], [], []>} : vector<16x128xbf16>, vector<128x128xbf16>, vector<16x128xf32> -> vector<16x128xf32>
    %84 = arith.addf %82, %83 : vector<16x128xf32>
    %85 = math.tanh %84 : vector<16x128xf32>
    %86 = arith.truncf %85 : vector<16x128xf32> to vector<16x128xbf16>
    %c64 = arith.constant 64 : index
    %c0_34 = arith.constant 0 : index
    %87 = vector.load %arg12[%c64, %c0_34] : memref<128x128xbf16, #tpu.memory_space<vmem>>, vector<16x128xbf16>
    tpu.vector_store %arg12[%c64, %c0_34], %86 {strides = array<i32>} : memref<128x128xbf16, #tpu.memory_space<vmem>>, vector<16x128xbf16>,
    %88 = vector.extract_strided_slice %10 {offsets = [80, 0], sizes = [16, 128], strides = [1, 1]} : vector<128x128xf32> to vector<16x128xf32>
    %cst_35 = arith.constant dense<0.000000e+00> : vector<16x128xf32>
    %89 = tpu.matmul %86, %12, %cst_35 {dimension_numbers = #tpu.dot_dimension_numbers<[1], [0], [0], [1], [0, 0, 1, 1], [], []>} : vector<16x128xbf16>, vector<128x128xbf16>, vector<16x128xf32> -> vector<16x128xf32>
    %90 = arith.addf %88, %89 : vector<16x128xf32>
    %91 = math.tanh %90 : vector<16x128xf32>
    %92 = arith.truncf %91 : vector<16x128xf32> to vector<16x128xbf16>
    %c80 = arith.constant 80 : index
    %c0_36 = arith.constant 0 : index
    %93 = vector.load %arg12[%c80, %c0_36] : memref<128x128xbf16, #tpu.memory_space<vmem>>, vector<16x128xbf16>
    tpu.vector_store %arg12[%c80, %c0_36], %92 {strides = array<i32>} : memref<128x128xbf16, #tpu.memory_space<vmem>>, vector<16x128xbf16>,
    %94 = vector.extract_strided_slice %10 {offsets = [96, 0], sizes = [16, 128], strides = [1, 1]} : vector<128x128xf32> to vector<16x128xf32>
    %cst_37 = arith.constant dense<0.000000e+00> : vector<16x128xf32>
    %95 = tpu.matmul %92, %12, %cst_37 {dimension_numbers = #tpu.dot_dimension_numbers<[1], [0], [0], [1], [0, 0, 1, 1], [], []>} : vector<16x128xbf16>, vector<128x128xbf16>, vector<16x128xf32> -> vector<16x128xf32>
    %96 = arith.addf %94, %95 : vector<16x128xf32>
    %97 = math.tanh %96 : vector<16x128xf32>
    %98 = arith.truncf %97 : vector<16x128xf32> to vector<16x128xbf16>
    %c96 = arith.constant 96 : index
    %c0_38 = arith.constant 0 : index
    %99 = vector.load %arg12[%c96, %c0_38] : memref<128x128xbf16, #tpu.memory_space<vmem>>, vector<16x128xbf16>
    tpu.vector_store %arg12[%c96, %c0_38], %98 {strides = array<i32>} : memref<128x128xbf16, #tpu.memory_space<vmem>>, vector<16x128xbf16>,
    %100 = vector.extract_strided_slice %10 {offsets = [112, 0], sizes = [16, 128], strides = [1, 1]} : vector<128x128xf32> to vector<16x128xf32>
    %cst_39 = arith.constant dense<0.000000e+00> : vector<16x128xf32>
    %101 = tpu.matmul %98, %12, %cst_39 {dimension_numbers = #tpu.dot_dimension_numbers<[1], [0], [0], [1], [0, 0, 1, 1], [], []>} : vector<16x128xbf16>, vector<128x128xbf16>, vector<16x128xf32> -> vector<16x128xf32>
    %102 = arith.addf %100, %101 : vector<16x128xf32>
    %103 = math.tanh %102 : vector<16x128xf32>
    %104 = arith.truncf %103 : vector<16x128xf32> to vector<16x128xbf16>
    %c112 = arith.constant 112 : index
    %c0_40 = arith.constant 0 : index
    %105 = vector.load %arg12[%c112, %c0_40] : memref<128x128xbf16, #tpu.memory_space<vmem>>, vector<16x128xbf16>
    tpu.vector_store %arg12[%c112, %c0_40], %104 {strides = array<i32>} : memref<128x128xbf16, #tpu.memory_space<vmem>>, vector<16x128xbf16>,
    %c0_41 = arith.constant 0 : index
    %c0_42 = arith.constant 0 : index
    %106 = vector.load %arg12[%c0_41, %c0_42] : memref<128x128xbf16, #tpu.memory_space<vmem>>, vector<128x128xbf16>
    %c0_43 = arith.constant 0 : index
    %c0_44 = arith.constant 0 : index
    %107 = vector.load %arg9[%c0_43, %c0_44] : memref<128x256xbf16, #tpu.memory_space<vmem>>, vector<128x256xbf16>
    %cst_45 = arith.constant dense<0.000000e+00> : vector<128x256xf32>
    %108 = tpu.matmul %106, %107, %cst_45 {dimension_numbers = #tpu.dot_dimension_numbers<[1], [0], [0], [1], [0, 0, 1, 1], [], []>} : vector<128x128xbf16>, vector<128x256xbf16>, vector<128x256xf32> -> vector<128x256xf32>
    %c0_46 = arith.constant 0 : index
    %c0_47 = arith.constant 0 : index
    %109 = vector.load %arg10[%c0_46, %c0_47] : memref<1x256xf32, #tpu.memory_space<vmem>>, vector<1x256xf32>
    %110 = vector.broadcast %109 : vector<1x256xf32> to vector<128x256xf32>
    %111 = arith.addf %108, %110 : vector<128x256xf32>
    %c0_48 = arith.constant 0 : index
    %c0_49 = arith.constant 0 : index
    %112 = vector.load %arg11[%c0_48, %c0_49] : memref<128x256xf32, #tpu.memory_space<vmem>>, vector<128x256xf32>
    tpu.vector_store %arg11[%c0_48, %c0_49], %111 {strides = array<i32>} : memref<128x256xf32, #tpu.memory_space<vmem>>, vector<128x256xf32>,
    return
  }
  func.func @transform_0(%arg0: i32) -> (i32, i32) {
    %c0_i32 = arith.constant 0 : i32
    %c0_i32_0 = arith.constant 0 : i32
    return %arg0, %c0_i32 : i32, i32
  }
  func.func @transform_1(%arg0: i32) -> (i32, i32) {
    %c0_i32 = arith.constant 0 : i32
    %c0_i32_0 = arith.constant 0 : i32
    %c0_i32_1 = arith.constant 0 : i32
    return %c0_i32, %c0_i32_0 : i32, i32
  }
  func.func @transform_2(%arg0: i32) -> (i32, i32) {
    %c0_i32 = arith.constant 0 : i32
    %c0_i32_0 = arith.constant 0 : i32
    %c0_i32_1 = arith.constant 0 : i32
    return %c0_i32, %c0_i32_0 : i32, i32
  }
  func.func @transform_3(%arg0: i32) -> (i32, i32) {
    %c0_i32 = arith.constant 0 : i32
    %c0_i32_0 = arith.constant 0 : i32
    %c0_i32_1 = arith.constant 0 : i32
    return %c0_i32, %c0_i32_0 : i32, i32
  }
  func.func @transform_4(%arg0: i32) -> (i32, i32) {
    %c0_i32 = arith.constant 0 : i32
    %c0_i32_0 = arith.constant 0 : i32
    %c0_i32_1 = arith.constant 0 : i32
    return %c0_i32, %c0_i32_0 : i32, i32
  }
  func.func @transform_5(%arg0: i32) -> (i32, i32) {
    %c0_i32 = arith.constant 0 : i32
    %c0_i32_0 = arith.constant 0 : i32
    %c0_i32_1 = arith.constant 0 : i32
    return %c0_i32, %c0_i32_0 : i32, i32
  }
  func.func @transform_6(%arg0: i32) -> (i32, i32) {
    %c0_i32 = arith.constant 0 : i32
    %c0_i32_0 = arith.constant 0 : i32
    %c0_i32_1 = arith.constant 0 : i32
    return %c0_i32, %c0_i32_0 : i32, i32
  }
  func.func @transform_7(%arg0: i32) -> (i32, i32) {
    %c0_i32 = arith.constant 0 : i32
    %c0_i32_0 = arith.constant 0 : i32
    %c0_i32_1 = arith.constant 0 : i32
    return %c0_i32, %c0_i32_0 : i32, i32
  }
  func.func @transform_8(%arg0: i32) -> (i32, i32) {
    %c0_i32 = arith.constant 0 : i32
    %c0_i32_0 = arith.constant 0 : i32
    %c0_i32_1 = arith.constant 0 : i32
    return %c0_i32, %c0_i32_0 : i32, i32
  }
  func.func @transform_9(%arg0: i32) -> (i32, i32) {
    %c0_i32 = arith.constant 0 : i32
    %c0_i32_0 = arith.constant 0 : i32
    %c0_i32_1 = arith.constant 0 : i32
    return %c0_i32, %c0_i32_0 : i32, i32
  }
  func.func @transform_10(%arg0: i32) -> (i32, i32) {
    %c0_i32 = arith.constant 0 : i32
    %c0_i32_0 = arith.constant 0 : i32
    return %arg0, %c0_i32 : i32, i32
  }
}

</mosaic_0001>

<llo_original>
// kernel: autoencoder_rnn_forward.1
$region0: #{autoencoder_rnn_forward.1}
  #allocation0 [shape = 'u32[]', space=smem, size = 0x4, offset = 0x4, fixed_abs, tag = 'smem constant byte address 0x4 - core index']
  #allocation1 [shape = 'u32[144,128]{1,0:T(1,128)}', space=vmem, size = 0x12000, scoped, tag = 'internal scratch']
  #allocation2 [shape = 'bf16[128,128]{1,0:T(16,128)(2,1)}', space=vmem, size = 0x8000, scoped, tag = 'scratch operand']
  %s0 = inlined_call_operand.vmem [shape: bf16[256,128], index: 0, kind: input, shape index: {}]
  %s1 = inlined_call_operand.vmem [shape: bf16[128,256], index: 1, kind: input, shape index: {}]
  %s2 = inlined_call_operand.vmem [shape: f32[1,128], index: 2, kind: input, shape index: {}]
  %s3 = inlined_call_operand.vmem [shape: bf16[128,128], index: 3, kind: input, shape index: {}]
  %s4 = inlined_call_operand.vmem [shape: bf16[128,128], index: 4, kind: input, shape index: {}]
  %s5 = inlined_call_operand.vmem [shape: bf16[128,128], index: 5, kind: input, shape index: {}]
  %s6 = inlined_call_operand.vmem [shape: f32[1,128], index: 6, kind: input, shape index: {}]
  %s7 = inlined_call_operand.vmem [shape: bf16[128,128], index: 7, kind: input, shape index: {}]
  %s8 = inlined_call_operand.vmem [shape: bf16[128,256], index: 8, kind: input, shape index: {}]
  %s9 = inlined_call_operand.vmem [shape: f32[1,256], index: 9, kind: input, shape index: {}]
  %s10 = inlined_call_operand.vmem [shape: f32[256,256], index: 10, kind: output, shape index: {}]
  %s11 = sld [smem:[#allocation0]]
  $region73: #{autoencoder_rnn_forward.1} parent=0
    _
  %s13 = ssub.s32 1, %s11
  %s14 = scalar_select 0, %s13, %s11
  loop: start=0, step=1, limit=4
  $region2: #{autoencoder_rnn_forward.1} parent=0 // loop_pre_header
    _
  $region3: #{autoencoder_rnn_forward.1} parent=0 // loop_header
    %s16 = sphi 0, %s20
    %p17 = scmp.ge.s32.totalorder %s16, 4
    %s26 = sphi 0, %s28
    %s29 = sphi 0, %s26
    %s30 = sphi 0, %s29
    %s46 = sphi 0, %s30
    %s50 = sphi 0, %s50
    %s52 = sphi 0, %s50
    %s53 = sphi 0, %s52
    %s67 = sphi 0, %s53
    %s71 = sphi 0, %s71
    %s73 = sphi 0, %s71
    %s74 = sphi 0, %s73
    %s88 = sphi 0, %s74
    %s92 = sphi 0, %s92
    %s94 = sphi 0, %s92
    %s95 = sphi 0, %s94
    %s109 = sphi 0, %s95
    %s113 = sphi 0, %s113
    %s115 = sphi 0, %s113
    %s116 = sphi 0, %s115
    %s130 = sphi 0, %s116
    %s134 = sphi 0, %s134
    %s136 = sphi 0, %s134
    %s137 = sphi 0, %s136
    %s151 = sphi 0, %s137
    %s155 = sphi 0, %s155
    %s157 = sphi 0, %s155
    %s158 = sphi 0, %s157
    %s172 = sphi 0, %s158
    %s176 = sphi 0, %s176
    %s178 = sphi 0, %s176
    %s179 = sphi 0, %s178
    %s193 = sphi 0, %s179
    %s197 = sphi 0, %s197
    %s199 = sphi 0, %s197
    %s200 = sphi 0, %s199
    %s214 = sphi 0, %s200
    %s218 = sphi 0, %s218
    %s220 = sphi 0, %s218
    %s221 = sphi 0, %s220
    %s235 = sphi 0, %s221
    %s241 = sphi 0, %s243
    %s244 = sphi 0, %s241
    %s245 = sphi 0, %s244
    %s261 = sphi 0, %s245
  $region4: #{autoencoder_rnn_forward.1} parent=0 // loop_header_branch
    %19 = sbr.rel (%p17) target = $region8
  $region5: #{autoencoder_rnn_forward.1} parent=0 // loop_body
    %s21 = ssub.s32 %s16, 1
    %s22 = ssub.s32 %s16, 2
    %s23 = sadd.s32 %s16, 1
    %s24 = ssub.s32 %s16, %s23
    %p25 = scmp.eq.s32.totalorder %s24, 0
    %s27 = sadd.s32 %s26, 1
    %s28 = scalar_select %p25, %s26, %s27
    %p31 = pneg %p25
    %p32 = scmp.eq.s32.totalorder %s16, 1
    %p33 = por %p31, %p32
    %p34 = scmp.ne.s32.totalorder %s26, %s29
    %p35 = scmp.eq.s32.totalorder %s16, 0
    %p36 = por %p34, %p35
    %p37 = scmp.ne.s32.totalorder %s26, %s29
    %p38 = scmp.eq.s32.totalorder %s21, 1
    %p39 = por %p37, %p38
    %p40 = scmp.ne.s32.totalorder %s29, %s30
    %p41 = scmp.eq.s32.totalorder %s21, 0
    %p42 = por %p40, %p41
    %p43 = scmp.ne.s32.totalorder %s29, %s30
    %p44 = scmp.eq.s32.totalorder %s22, 1
    %p45 = por %p43, %p44
    %p47 = scmp.ne.s32.totalorder %s30, %s46
    %p48 = scmp.eq.s32.totalorder %s22, 0
    %p49 = por %p47, %p48
    %s51 = sadd.s32 %s50, 1
    %p54 = scmp.eq.s32.totalorder %s16, 1
    %p55 = scmp.ne.s32.totalorder %s50, %s52
    %p56 = scmp.eq.s32.totalorder %s16, 0
    %p57 = por %p55, %p56
    %p58 = scmp.ne.s32.totalorder %s50, %s52
    %p59 = scmp.eq.s32.totalorder %s21, 1
    %p60 = por %p58, %p59
    %p61 = scmp.ne.s32.totalorder %s52, %s53
    %p62 = scmp.eq.s32.totalorder %s21, 0
    %p63 = por %p61, %p62
    %p64 = scmp.ne.s32.totalorder %s52, %s53
    %p65 = scmp.eq.s32.totalorder %s22, 1
    %p66 = por %p64, %p65
    %p68 = scmp.ne.s32.totalorder %s53, %s67
    %p69 = scmp.eq.s32.totalorder %s22, 0
    %p70 = por %p68, %p69
    %s72 = sadd.s32 %s71, 1
    %p75 = scmp.eq.s32.totalorder %s16, 1
    %p76 = scmp.ne.s32.totalorder %s71, %s73
    %p77 = scmp.eq.s32.totalorder %s16, 0
    %p78 = por %p76, %p77
    %p79 = scmp.ne.s32.totalorder %s71, %s73
    %p80 = scmp.eq.s32.totalorder %s21, 1
    %p81 = por %p79, %p80
    %p82 = scmp.ne.s32.totalorder %s73, %s74
    %p83 = scmp.eq.s32.totalorder %s21, 0
    %p84 = por %p82, %p83
    %p85 = scmp.ne.s32.totalorder %s73, %s74
    %p86 = scmp.eq.s32.totalorder %s22, 1
    %p87 = por %p85, %p86
    %p89 = scmp.ne.s32.totalorder %s74, %s88
    %p90 = scmp.eq.s32.totalorder %s22, 0
    %p91 = por %p89, %p90
    %s93 = sadd.s32 %s92, 1
    %p96 = scmp.eq.s32.totalorder %s16, 1
    %p97 = scmp.ne.s32.totalorder %s92, %s94
    %p98 = scmp.eq.s32.totalorder %s16, 0
    %p99 = por %p97, %p98
    %p100 = scmp.ne.s32.totalorder %s92, %s94
    %p101 = scmp.eq.s32.totalorder %s21, 1
    %p102 = por %p100, %p101
    %p103 = scmp.ne.s32.totalorder %s94, %s95
    %p104 = scmp.eq.s32.totalorder %s21, 0
    %p105 = por %p103, %p104
    %p106 = scmp.ne.s32.totalorder %s94, %s95
    %p107 = scmp.eq.s32.totalorder %s22, 1
    %p108 = por %p106, %p107
    %p110 = scmp.ne.s32.totalorder %s95, %s109
    %p111 = scmp.eq.s32.totalorder %s22, 0
    %p112 = por %p110, %p111
    %s114 = sadd.s32 %s113, 1
    %p117 = scmp.eq.s32.totalorder %s16, 1
    %p118 = scmp.ne.s32.totalorder %s113, %s115
    %p119 = scmp.eq.s32.totalorder %s16, 0
    %p120 = por %p118, %p119
    %p121 = scmp.ne.s32.totalorder %s113, %s115
    %p122 = scmp.eq.s32.totalorder %s21, 1
    %p123 = por %p121, %p122
    %p124 = scmp.ne.s32.totalorder %s115, %s116
    %p125 = scmp.eq.s32.totalorder %s21, 0
    %p126 = por %p124, %p125
    %p127 = scmp.ne.s32.totalorder %s115, %s116
    %p128 = scmp.eq.s32.totalorder %s22, 1
    %p129 = por %p127, %p128
    %p131 = scmp.ne.s32.totalorder %s116, %s130
    %p132 = scmp.eq.s32.totalorder %s22, 0
    %p133 = por %p131, %p132
    %s135 = sadd.s32 %s134, 1
    %p138 = scmp.eq.s32.totalorder %s16, 1
    %p139 = scmp.ne.s32.totalorder %s134, %s136
    %p140 = scmp.eq.s32.totalorder %s16, 0
    %p141 = por %p139, %p140
    %p142 = scmp.ne.s32.totalorder %s134, %s136
    %p143 = scmp.eq.s32.totalorder %s21, 1
    %p144 = por %p142, %p143
    %p145 = scmp.ne.s32.totalorder %s136, %s137
    %p146 = scmp.eq.s32.totalorder %s21, 0
    %p147 = por %p145, %p146
    %p148 = scmp.ne.s32.totalorder %s136, %s137
    %p149 = scmp.eq.s32.totalorder %s22, 1
    %p150 = por %p148, %p149
    %p152 = scmp.ne.s32.totalorder %s137, %s151
    %p153 = scmp.eq.s32.totalorder %s22, 0
    %p154 = por %p152, %p153
    %s156 = sadd.s32 %s155, 1
    %p159 = scmp.eq.s32.totalorder %s16, 1
    %p160 = scmp.ne.s32.totalorder %s155, %s157
    %p161 = scmp.eq.s32.totalorder %s16, 0
    %p162 = por %p160, %p161
    %p163 = scmp.ne.s32.totalorder %s155, %s157
    %p164 = scmp.eq.s32.totalorder %s21, 1
    %p165 = por %p163, %p164
    %p166 = scmp.ne.s32.totalorder %s157, %s158
    %p167 = scmp.eq.s32.totalorder %s21, 0
    %p168 = por %p166, %p167
    %p169 = scmp.ne.s32.totalorder %s157, %s158
    %p170 = scmp.eq.s32.totalorder %s22, 1
    %p171 = por %p169, %p170
    %p173 = scmp.ne.s32.totalorder %s158, %s172
    %p174 = scmp.eq.s32.totalorder %s22, 0
    %p175 = por %p173, %p174
    %s177 = sadd.s32 %s176, 1
    %p180 = scmp.eq.s32.totalorder %s16, 1
    %p181 = scmp.ne.s32.totalorder %s176, %s178
    %p182 = scmp.eq.s32.totalorder %s16, 0
    %p183 = por %p181, %p182
    %p184 = scmp.ne.s32.totalorder %s176, %s178
    %p185 = scmp.eq.s32.totalorder %s21, 1
    %p186 = por %p184, %p185
    %p187 = scmp.ne.s32.totalorder %s178, %s179
    %p188 = scmp.eq.s32.totalorder %s21, 0
    %p189 = por %p187, %p188
    %p190 = scmp.ne.s32.totalorder %s178, %s179
    %p191 = scmp.eq.s32.totalorder %s22, 1
    %p192 = por %p190, %p191
    %p194 = scmp.ne.s32.totalorder %s179, %s193
    %p195 = scmp.eq.s32.totalorder %s22, 0
    %p196 = por %p194, %p195
    %s198 = sadd.s32 %s197, 1
    %p201 = scmp.eq.s32.totalorder %s16, 1
    %p202 = scmp.ne.s32.totalorder %s197, %s199
    %p203 = scmp.eq.s32.totalorder %s16, 0
    %p204 = por %p202, %p203
    %p205 = scmp.ne.s32.totalorder %s197, %s199
    %p206 = scmp.eq.s32.totalorder %s21, 1
    %p207 = por %p205, %p206
    %p208 = scmp.ne.s32.totalorder %s199, %s200
    %p209 = scmp.eq.s32.totalorder %s21, 0
    %p210 = por %p208, %p209
    %p211 = scmp.ne.s32.totalorder %s199, %s200
    %p212 = scmp.eq.s32.totalorder %s22, 1
    %p213 = por %p211, %p212
    %p215 = scmp.ne.s32.totalorder %s200, %s214
    %p216 = scmp.eq.s32.totalorder %s22, 0
    %p217 = por %p215, %p216
    %s219 = sadd.s32 %s218, 1
    %p222 = scmp.eq.s32.totalorder %s16, 1
    %p223 = scmp.ne.s32.totalorder %s218, %s220
    %p224 = scmp.eq.s32.totalorder %s16, 0
    %p225 = por %p223, %p224
    %p226 = scmp.ne.s32.totalorder %s218, %s220
    %p227 = scmp.eq.s32.totalorder %s21, 1
    %p228 = por %p226, %p227
    %p229 = scmp.ne.s32.totalorder %s220, %s221
    %p230 = scmp.eq.s32.totalorder %s21, 0
    %p231 = por %p229, %p230
    %p232 = scmp.ne.s32.totalorder %s220, %s221
    %p233 = scmp.eq.s32.totalorder %s22, 1
    %p234 = por %p232, %p233
    %p236 = scmp.ne.s32.totalorder %s221, %s235
    %p237 = scmp.eq.s32.totalorder %s22, 0
    %p238 = por %p236, %p237
    %s239 = ssub.s32 %s16, %s23
    %p240 = scmp.eq.s32.totalorder %s239, 0
    %s242 = sadd.s32 %s241, 1
    %s243 = scalar_select %p240, %s241, %s242
    %p246 = pneg %p240
    %p247 = scmp.eq.s32.totalorder %s16, 1
    %p248 = por %p246, %p247
    %p249 = scmp.ne.s32.totalorder %s241, %s244
    %p250 = scmp.eq.s32.totalorder %s16, 0
    %p251 = por %p249, %p250
    %p252 = scmp.ne.s32.totalorder %s241, %s244
    %p253 = scmp.eq.s32.totalorder %s21, 1
    %p254 = por %p252, %p253
    %p255 = scmp.ne.s32.totalorder %s244, %s245
    %p256 = scmp.eq.s32.totalorder %s21, 0
    %p257 = por %p255, %p256
    %p258 = scmp.ne.s32.totalorder %s244, %s245
    %p259 = scmp.eq.s32.totalorder %s22, 1
    %p260 = por %p258, %p259
    %p262 = scmp.ne.s32.totalorder %s245, %s261
    %p263 = scmp.eq.s32.totalorder %s22, 0
    %p264 = por %p262, %p263
    %p265 = scmp.le.s32.totalorder 1, %s16
    %p266 = scmp.lt.s32.totalorder %s16, 3
    %p267 = pnand %p265, %p266
    %p268 = pneg %p267
    // Predicated region
    $region9: #{autoencoder_rnn_forward.1} parent=5 // pred_check
      _
    $region10: #{autoencoder_rnn_forward.1} parent=5 // pred_check_branch
      %270 = sbr.rel (%p267) target = $region12
    $region11: #{autoencoder_rnn_forward.1} parent=5 // pred_region
      %s271 = ssub.s32 %s16, 1
      // Predicated region
      $region13: #{autoencoder_rnn_forward.1} parent=11 // pred_check
        %p272 = pneg %p63
      $region14: #{autoencoder_rnn_forward.1} parent=11 // pred_check_branch
        %274 = sbr.rel (%p272) target = $region16
      $region15: #{autoencoder_rnn_forward.1} parent=11 // pred_region
        _
      $region16: #{autoencoder_rnn_forward.1} parent=11 // pred_fallthru
        _
      // Predicated region
      $region17: #{autoencoder_rnn_forward.1} parent=11 // pred_check
        %p275 = pneg %p84
      $region18: #{autoencoder_rnn_forward.1} parent=11 // pred_check_branch
        %277 = sbr.rel (%p275) target = $region20
      $region19: #{autoencoder_rnn_forward.1} parent=11 // pred_region
        _
      $region20: #{autoencoder_rnn_forward.1} parent=11 // pred_fallthru
        _
      // Predicated region
      $region21: #{autoencoder_rnn_forward.1} parent=11 // pred_check
        %p278 = pneg %p105
      $region22: #{autoencoder_rnn_forward.1} parent=11 // pred_check_branch
        %280 = sbr.rel (%p278) target = $region24
      $region23: #{autoencoder_rnn_forward.1} parent=11 // pred_region
        _
      $region24: #{autoencoder_rnn_forward.1} parent=11 // pred_fallthru
        _
      // Predicated region
      $region25: #{autoencoder_rnn_forward.1} parent=11 // pred_check
        %p281 = pneg %p126
      $region26: #{autoencoder_rnn_forward.1} parent=11 // pred_check_branch
        %283 = sbr.rel (%p281) target = $region28
      $region27: #{autoencoder_rnn_forward.1} parent=11 // pred_region
        _
      $region28: #{autoencoder_rnn_forward.1} parent=11 // pred_fallthru
        _
      // Predicated region
      $region29: #{autoencoder_rnn_forward.1} parent=11 // pred_check
        %p284 = pneg %p147
      $region30: #{autoencoder_rnn_forward.1} parent=11 // pred_check_branch
        %286 = sbr.rel (%p284) target = $region32
      $region31: #{autoencoder_rnn_forward.1} parent=11 // pred_region
        _
      $region32: #{autoencoder_rnn_forward.1} parent=11 // pred_fallthru
        _
      // Predicated region
      $region33: #{autoencoder_rnn_forward.1} parent=11 // pred_check
        %p287 = pneg %p168
      $region34: #{autoencoder_rnn_forward.1} parent=11 // pred_check_branch
        %289 = sbr.rel (%p287) target = $region36
      $region35: #{autoencoder_rnn_forward.1} parent=11 // pred_region
        _
      $region36: #{autoencoder_rnn_forward.1} parent=11 // pred_fallthru
        _
      // Predicated region
      $region37: #{autoencoder_rnn_forward.1} parent=11 // pred_check
        %p290 = pneg %p189
      $region38: #{autoencoder_rnn_forward.1} parent=11 // pred_check_branch
        %292 = sbr.rel (%p290) target = $region40
      $region39: #{autoencoder_rnn_forward.1} parent=11 // pred_region
        _
      $region40: #{autoencoder_rnn_forward.1} parent=11 // pred_fallthru
        _
      // Predicated region
      $region41: #{autoencoder_rnn_forward.1} parent=11 // pred_check
        %p293 = pneg %p210
      $region42: #{autoencoder_rnn_forward.1} parent=11 // pred_check_branch
        %295 = sbr.rel (%p293) target = $region44
      $region43: #{autoencoder_rnn_forward.1} parent=11 // pred_region
        _
      $region44: #{autoencoder_rnn_forward.1} parent=11 // pred_fallthru
        _
      // Predicated region
      $region45: #{autoencoder_rnn_forward.1} parent=11 // pred_check
        %p296 = pneg %p231
      $region46: #{autoencoder_rnn_forward.1} parent=11 // pred_check_branch
        %298 = sbr.rel (%p296) target = $region48
      $region47: #{autoencoder_rnn_forward.1} parent=11 // pred_region
        _
      $region48: #{autoencoder_rnn_forward.1} parent=11 // pred_fallthru
        _
    $region12: #{autoencoder_rnn_forward.1} parent=5 // pred_fallthru
      _
    %p299 = scmp.lt.s32.totalorder %s16, 2
    // Predicated region
    $region49: #{autoencoder_rnn_forward.1} parent=5 // pred_check
      %p300 = pneg %p299
    $region50: #{autoencoder_rnn_forward.1} parent=5 // pred_check_branch
      %302 = sbr.rel (%p300) target = $region52
    $region51: #{autoencoder_rnn_forward.1} parent=5 // pred_region
      // Predicated region
      $region53: #{autoencoder_rnn_forward.1} parent=51 // pred_check
        %p303 = pneg %p36
      $region54: #{autoencoder_rnn_forward.1} parent=51 // pred_check_branch
        %305 = sbr.rel (%p303) target = $region56
      $region55: #{autoencoder_rnn_forward.1} parent=51 // pred_region
        %s306 = smul.u32 16, %s16
        %p307 = scmp.lt.s32.totalorder %s306, 31
        %s308 = scalar_select %p307, %s306, 31
        %s309 = smul.addr %s308, 4
        %s310 = scalar_lea.vmem %s0, %s309
        %s311 = smul.u32 16, %s16
      $region56: #{autoencoder_rnn_forward.1} parent=51 // pred_fallthru
        _
    $region52: #{autoencoder_rnn_forward.1} parent=5 // pred_fallthru
      _
    %p312 = scmp.le.s32.totalorder 1, %s16
    %p313 = scmp.lt.s32.totalorder %s16, 3
    %p314 = pnand %p312, %p313
    %p315 = pneg %p314
    // Predicated region
    $region57: #{autoencoder_rnn_forward.1} parent=5 // pred_check
      _
    $region58: #{autoencoder_rnn_forward.1} parent=5 // pred_check_branch
      %317 = sbr.rel (%p314) target = $region60
    $region59: #{autoencoder_rnn_forward.1} parent=5 // pred_region
      %s318 = ssub.s32 %s16, 1
      %s319 = smul.u32 16, %s21
      %p320 = scmp.lt.s32.totalorder %s319, 31
      %s321 = scalar_select %p320, %s319, 31
      %s322 = smul.addr %s321, 4
      %s323 = scalar_lea.vmem %s0, %s322
      %p324 = pneg %p42
      %p325 = pneg %p39
      %p326 = pneg %p63
      %p327 = pneg %p60
      %p328 = pneg %p84
      %p329 = pneg %p81
      %p330 = pneg %p105
      %p331 = pneg %p102
      %p332 = pneg %p126
      %p333 = pneg %p123
      %p334 = pneg %p147
      %p335 = pneg %p144
      %p336 = pneg %p168
      %p337 = pneg %p165
      %p338 = pneg %p189
      %p339 = pneg %p186
      %p340 = pneg %p210
      %p341 = pneg %p207
      %p342 = pneg %p231
      %p343 = pneg %p228
      %p344 = pneg %p257
      %p345 = pneg %p254
      %s346 = smul.u32 16, %s21
      %p347 = scmp.lt.s32.totalorder %s346, 31
      %s348 = scalar_select %p347, %s346, 31
      %s349 = smul.addr %s348, 2
      %s350 = smul.addr %s349, 8
      %s351 = scalar_lea.vmem %s10, %s350
      %s352 = smul.u32 16, %s21
      %p353 = scmp.lt.s32.totalorder %s352, 31
      %s354 = scalar_select %p353, %s352, 31
      %s355 = smul.addr %s354, 4
      %s356 = scalar_lea.vmem %s0, %s355
      %s357 = smul.u32 16, %s21
      %s358 = smul.u32 16, %s21
      %p359 = scmp.lt.s32.totalorder %s358, 31
      %s360 = scalar_select %p359, %s358, 31
      %s361 = smul.addr %s360, 2
      %s362 = smul.addr %s361, 8
      %s363 = scalar_lea.vmem %s10, %s362
      %s364 = smul.u32 16, %s21
      %v366 = vld [vmem:[%s356] sm:$0xf]
      %v367 = vld [vmem:[%s356 + $0x4] sm:$0xf]
      %v368 = vld [vmem:[%s356 + $0x8] sm:$0xf]
      %v369 = vld [vmem:[%s356 + $0xc] sm:$0xf]
      %v370 = vld [vmem:[%s356 + $0x10] sm:$0xf]
      %v371 = vld [vmem:[%s356 + $0x14] sm:$0xf]
      %v372 = vld [vmem:[%s356 + $0x18] sm:$0xf]
      %v373 = vld [vmem:[%s356 + $0x1c] sm:$0xf]
      %v374 = vld [vmem:[%s356 + $0x20] sm:$0xf]
      %v375 = vld [vmem:[%s356 + $0x24] sm:$0xf]
      %v376 = vld [vmem:[%s356 + $0x28] sm:$0xf]
      %v377 = vld [vmem:[%s356 + $0x2c] sm:$0xf]
      %v378 = vld [vmem:[%s356 + $0x30] sm:$0xf]
      %v379 = vld [vmem:[%s356 + $0x34] sm:$0xf]
      %v380 = vld [vmem:[%s356 + $0x38] sm:$0xf]
      %v381 = vld [vmem:[%s356 + $0x3c] sm:$0xf]
      %v382 = vld [vmem:[%s1] sm:$0xff]
      %v383 = vld [vmem:[%s1 + $0x8] sm:$0xff]
      %v384 = vld [vmem:[%s1 + $0x10] sm:$0xff]
      %v385 = vld [vmem:[%s1 + $0x18] sm:$0xff]
      %v386 = vld [vmem:[%s1 + $0x20] sm:$0xff]
      %v387 = vld [vmem:[%s1 + $0x28] sm:$0xff]
      %v388 = vld [vmem:[%s1 + $0x30] sm:$0xff]
      %v389 = vld [vmem:[%s1 + $0x38] sm:$0xff]
      %v390 = vld [vmem:[%s1 + $0x40] sm:$0xff]
      %v391 = vld [vmem:[%s1 + $0x48] sm:$0xff]
      %v392 = vld [vmem:[%s1 + $0x50] sm:$0xff]
      %v393 = vld [vmem:[%s1 + $0x58] sm:$0xff]
      %v394 = vld [vmem:[%s1 + $0x60] sm:$0xff]
      %v395 = vld [vmem:[%s1 + $0x68] sm:$0xff]
      %v396 = vld [vmem:[%s1 + $0x70] sm:$0xff]
      %v397 = vld [vmem:[%s1 + $0x78] sm:$0xff]
      %v414 = vunpack.c.l.b16 %v366
      %v415 = vunpack.c.l.b16 %v367
      %v416 = vunpack.c.l.b16 %v368
      %v417 = vunpack.c.l.b16 %v369
      %v418 = vunpack.c.l.b16 %v370
      %v419 = vunpack.c.l.b16 %v371
      %v420 = vunpack.c.l.b16 %v372
      %v421 = vunpack.c.l.b16 %v373
      %v422 = vunpack.c.l.b16 %v374
      %v423 = vunpack.c.l.b16 %v375
      %v424 = vunpack.c.l.b16 %v376
      %v425 = vunpack.c.l.b16 %v377
      %v426 = vunpack.c.l.b16 %v378
      %v427 = vunpack.c.l.b16 %v379
      %v428 = vunpack.c.l.b16 %v380
      %v429 = vunpack.c.l.b16 %v381
      %v430 = vpack.c.b16 %v415, %v414
      %v431 = vpack.c.b16 %v417, %v416
      %v432 = vpack.c.b16 %v419, %v418
      %v433 = vpack.c.b16 %v421, %v420
      %v434 = vpack.c.b16 %v423, %v422
      %v435 = vpack.c.b16 %v425, %v424
      %v436 = vpack.c.b16 %v427, %v426
      %v437 = vpack.c.b16 %v429, %v428
      %v462 = vunpack.c.l.b16 %v382
      %v463 = vunpack.c.h.b16 %v382
      %v464 = vunpack.c.l.b16 %v383
      %v465 = vunpack.c.h.b16 %v383
      %v466 = vunpack.c.l.b16 %v384
      %v467 = vunpack.c.h.b16 %v384
      %v468 = vunpack.c.l.b16 %v385
      %v469 = vunpack.c.h.b16 %v385
      %v470 = vunpack.c.l.b16 %v386
      %v471 = vunpack.c.h.b16 %v386
      %v472 = vunpack.c.l.b16 %v387
      %v473 = vunpack.c.h.b16 %v387
      %v474 = vunpack.c.l.b16 %v388
      %v475 = vunpack.c.h.b16 %v388
      %v476 = vunpack.c.l.b16 %v389
      %v477 = vunpack.c.h.b16 %v389
      %v478 = vunpack.c.l.b16 %v390
      %v479 = vunpack.c.h.b16 %v390
      %v480 = vunpack.c.l.b16 %v391
      %v481 = vunpack.c.h.b16 %v391
      %v482 = vunpack.c.l.b16 %v392
      %v483 = vunpack.c.h.b16 %v392
      %v484 = vunpack.c.l.b16 %v393
      %v485 = vunpack.c.h.b16 %v393
      %v486 = vunpack.c.l.b16 %v394
      %v487 = vunpack.c.h.b16 %v394
      %v488 = vunpack.c.l.b16 %v395
      %v489 = vunpack.c.h.b16 %v395
      %v490 = vunpack.c.l.b16 %v396
      %v491 = vunpack.c.h.b16 %v396
      %v492 = vunpack.c.l.b16 %v397
      %v493 = vunpack.c.h.b16 %v397
      %v494 = vpack.c.b16 %v464, %v462
      %v495 = vpack.c.b16 %v465, %v463
      %v496 = vpack.c.b16 %v468, %v466
      %v497 = vpack.c.b16 %v469, %v467
      %v498 = vpack.c.b16 %v472, %v470
      %v499 = vpack.c.b16 %v473, %v471
      %v500 = vpack.c.b16 %v476, %v474
      %v501 = vpack.c.b16 %v477, %v475
      %v502 = vpack.c.b16 %v480, %v478
      %v503 = vpack.c.b16 %v481, %v479
      %v504 = vpack.c.b16 %v484, %v482
      %v505 = vpack.c.b16 %v485, %v483
      %v506 = vpack.c.b16 %v488, %v486
      %v507 = vpack.c.b16 %v489, %v487
      %v508 = vpack.c.b16 %v492, %v490
      %v509 = vpack.c.b16 %v493, %v491
      %526 = vmatprep.subr.bf16.mxu0 %v495
      %527 = vmatpush1.bf16.msra.mxu0 %v494
      %528 = vmatprep.subr.bf16.mxu0 %v497
      %529 = vmatpush1.bf16.msra.mxu0 %v496
      %530 = vmatprep.subr.bf16.mxu0 %v499
      %531 = vmatpush1.bf16.msra.mxu0 %v498
      %532 = vmatprep.subr.bf16.mxu0 %v501
      %533 = vmatpush1.bf16.msra.mxu0 %v500
      %534 = vmatprep.subr.bf16.mxu0 %v503
      %535 = vmatpush1.bf16.msra.mxu0 %v502
      %536 = vmatprep.subr.bf16.mxu0 %v505
      %537 = vmatpush1.bf16.msra.mxu0 %v504
      %538 = vmatprep.subr.bf16.mxu0 %v507
      %539 = vmatpush1.bf16.msra.mxu0 %v506
      %540 = vmatprep.subr.bf16.mxu0 %v509
      %541 = vmatpush1.bf16.msra.mxu0 %v508
      %542 = vmatprep.subr.bf16.mxu0 0
      %543 = vmatpush1.bf16.msra.mxu0 0
      %544 = vmatprep.subr.bf16.mxu0 0
      %545 = vmatpush1.bf16.msra.mxu0 0
      %546 = vmatprep.subr.bf16.mxu0 0
      %547 = vmatpush1.bf16.msra.mxu0 0
      %548 = vmatprep.subr.bf16.mxu0 0
      %549 = vmatpush1.bf16.msra.mxu0 0
      %550 = vmatprep.subr.bf16.mxu0 0
      %551 = vmatpush1.bf16.msra.mxu0 0
      %552 = vmatprep.subr.bf16.mxu0 0
      %553 = vmatpush1.bf16.msra.mxu0 0
      %554 = vmatprep.subr.bf16.mxu0 0
      %555 = vmatpush1.bf16.msra.mxu0 0
      %556 = vmatprep.subr.bf16.mxu0 0
      %557 = vmatpush1.bf16.msra.mxu0 0
      %558 = vmatprep.mubr.bf16.mxu0 0
      %559 = vmatmul.mubr.bf16.gmra.mrb[0].mxu0 %v430
      %v560 = vpop.f32.mrb[0].mxu0
      %v561 = vadd.f32 0.0, %v560
      %v562 = vpop.f32.mrb[0].mxu0
      %v563 = vadd.f32 0.0, %v562
      %v564 = vpop.f32.mrb[0].mxu0
      %v565 = vadd.f32 0.0, %v564
      %v566 = vpop.f32.mrb[0].mxu0
      %v567 = vadd.f32 0.0, %v566
      %568 = vmatprep.mubr.bf16.mxu0 0
      %569 = vmatmul.mubr.bf16.gmra.mrb[0].mxu0 %v431
      %v570 = vpop.f32.mrb[0].mxu0
      %v571 = vadd.f32 0.0, %v570
      %v572 = vpop.f32.mrb[0].mxu0
      %v573 = vadd.f32 0.0, %v572
      %v574 = vpop.f32.mrb[0].mxu0
      %v575 = vadd.f32 0.0, %v574
      %v576 = vpop.f32.mrb[0].mxu0
      %v577 = vadd.f32 0.0, %v576
      %578 = vmatprep.mubr.bf16.mxu0 0
      %579 = vmatmul.mubr.bf16.gmra.mrb[0].mxu0 %v432
      %v580 = vpop.f32.mrb[0].mxu0
      %v581 = vadd.f32 0.0, %v580
      %v582 = vpop.f32.mrb[0].mxu0
      %v583 = vadd.f32 0.0, %v582
      %v584 = vpop.f32.mrb[0].mxu0
      %v585 = vadd.f32 0.0, %v584
      %v586 = vpop.f32.mrb[0].mxu0
      %v587 = vadd.f32 0.0, %v586
      %588 = vmatprep.mubr.bf16.mxu0 0
      %589 = vmatmul.mubr.bf16.gmra.mrb[0].mxu0 %v433
      %v590 = vpop.f32.mrb[0].mxu0
      %v591 = vadd.f32 0.0, %v590
      %v592 = vpop.f32.mrb[0].mxu0
      %v593 = vadd.f32 0.0, %v592
      %v594 = vpop.f32.mrb[0].mxu0
      %v595 = vadd.f32 0.0, %v594
      %v596 = vpop.f32.mrb[0].mxu0
      %v597 = vadd.f32 0.0, %v596
      %598 = vmatprep.mubr.bf16.mxu0 0
      %599 = vmatmul.mubr.bf16.gmra.mrb[0].mxu0 %v434
      %v600 = vpop.f32.mrb[0].mxu0
      %v601 = vadd.f32 0.0, %v600
      %v602 = vpop.f32.mrb[0].mxu0
      %v603 = vadd.f32 0.0, %v602
      %v604 = vpop.f32.mrb[0].mxu0
      %v605 = vadd.f32 0.0, %v604
      %v606 = vpop.f32.mrb[0].mxu0
      %v607 = vadd.f32 0.0, %v606
      %608 = vmatprep.mubr.bf16.mxu0 0
      %609 = vmatmul.mubr.bf16.gmra.mrb[0].mxu0 %v435
      %v610 = vpop.f32.mrb[0].mxu0
      %v611 = vadd.f32 0.0, %v610
      %v612 = vpop.f32.mrb[0].mxu0
      %v613 = vadd.f32 0.0, %v612
      %v614 = vpop.f32.mrb[0].mxu0
      %v615 = vadd.f32 0.0, %v614
      %v616 = vpop.f32.mrb[0].mxu0
      %v617 = vadd.f32 0.0, %v616
      %618 = vmatprep.mubr.bf16.mxu0 0
      %619 = vmatmul.mubr.bf16.gmra.mrb[0].mxu0 %v436
      %v620 = vpop.f32.mrb[0].mxu0
      %v621 = vadd.f32 0.0, %v620
      %v622 = vpop.f32.mrb[0].mxu0
      %v623 = vadd.f32 0.0, %v622
      %v624 = vpop.f32.mrb[0].mxu0
      %v625 = vadd.f32 0.0, %v624
      %v626 = vpop.f32.mrb[0].mxu0
      %v627 = vadd.f32 0.0, %v626
      %628 = vmatprep.mubr.bf16.mxu0 0
      %629 = vmatmul.mubr.bf16.gmra.mrb[0].mxu0 %v437
      %v630 = vpop.f32.mrb[0].mxu0
      %v631 = vadd.f32 0.0, %v630
      %v632 = vpop.f32.mrb[0].mxu0
      %v633 = vadd.f32 0.0, %v632
      %v634 = vpop.f32.mrb[0].mxu0
      %v635 = vadd.f32 0.0, %v634
      %v636 = vpop.f32.mrb[0].mxu0
      %v637 = vadd.f32 0.0, %v636
      %638 = vdwg.mxu0
      %v639 = vld [vmem:[%s2] sm:$0x1]
      %v641 = vlaneseq
      %v642 = vshrl.u32 %v641, 7
      %v643 = vsub.s32 0, %v642
      %v644 = vrot.slane %v639, %v643
      %v646 = vadd.f32 %v561, %v644
      %v647 = vadd.f32 %v565, %v644
      %v648 = vadd.f32 %v571, %v644
      %v649 = vadd.f32 %v575, %v644
      %v650 = vadd.f32 %v581, %v644
      %v651 = vadd.f32 %v585, %v644
      %v652 = vadd.f32 %v591, %v644
      %v653 = vadd.f32 %v595, %v644
      %v654 = vadd.f32 %v601, %v644
      %v655 = vadd.f32 %v605, %v644
      %v656 = vadd.f32 %v611, %v644
      %v657 = vadd.f32 %v615, %v644
      %v658 = vadd.f32 %v621, %v644
      %v659 = vadd.f32 %v625, %v644
      %v660 = vadd.f32 %v631, %v644
      %v661 = vadd.f32 %v635, %v644
      %v662 = vld [vmem:[%s6] sm:$0x1]
      %v664 = vlaneseq
      %v665 = vshrl.u32 %v664, 7
      %v666 = vsub.s32 0, %v665
      %v667 = vrot.slane %v662, %v666
      %v669 = vadd.f32 %v563, %v667
      %v670 = vadd.f32 %v567, %v667
      %v671 = vadd.f32 %v573, %v667
      %v672 = vadd.f32 %v577, %v667
      %v673 = vadd.f32 %v583, %v667
      %v674 = vadd.f32 %v587, %v667
      %v675 = vadd.f32 %v593, %v667
      %v676 = vadd.f32 %v597, %v667
      %v677 = vadd.f32 %v603, %v667
      %v678 = vadd.f32 %v607, %v667
      %v679 = vadd.f32 %v613, %v667
      %v680 = vadd.f32 %v617, %v667
      %v681 = vadd.f32 %v623, %v667
      %v682 = vadd.f32 %v627, %v667
      %v683 = vadd.f32 %v633, %v667
      %v684 = vadd.f32 %v637, %v667
      %v685 = vld [vmem:[%s3] sm:$0xf]
      %v686 = vld [vmem:[%s3 + $0x4] sm:$0xf]
      %v687 = vld [vmem:[%s3 + $0x8] sm:$0xf]
      %v688 = vld [vmem:[%s3 + $0xc] sm:$0xf]
      %v689 = vld [vmem:[%s3 + $0x10] sm:$0xf]
      %v690 = vld [vmem:[%s3 + $0x14] sm:$0xf]
      %v691 = vld [vmem:[%s3 + $0x18] sm:$0xf]
      %v692 = vld [vmem:[%s3 + $0x1c] sm:$0xf]
      %v693 = vld [vmem:[%s3 + $0x20] sm:$0xf]
      %v694 = vld [vmem:[%s3 + $0x24] sm:$0xf]
      %v695 = vld [vmem:[%s3 + $0x28] sm:$0xf]
      %v696 = vld [vmem:[%s3 + $0x2c] sm:$0xf]
      %v697 = vld [vmem:[%s3 + $0x30] sm:$0xf]
      %v698 = vld [vmem:[%s3 + $0x34] sm:$0xf]
      %v699 = vld [vmem:[%s3 + $0x38] sm:$0xf]
      %v700 = vld [vmem:[%s3 + $0x3c] sm:$0xf]
      %v701 = vld [vmem:[%s7] sm:$0xf]
      %v702 = vld [vmem:[%s7 + $0x4] sm:$0xf]
      %v703 = vld [vmem:[%s7 + $0x8] sm:$0xf]
      %v704 = vld [vmem:[%s7 + $0xc] sm:$0xf]
      %v705 = vld [vmem:[%s7 + $0x10] sm:$0xf]
      %v706 = vld [vmem:[%s7 + $0x14] sm:$0xf]
      %v707 = vld [vmem:[%s7 + $0x18] sm:$0xf]
      %v708 = vld [vmem:[%s7 + $0x1c] sm:$0xf]
      %v709 = vld [vmem:[%s7 + $0x20] sm:$0xf]
      %v710 = vld [vmem:[%s7 + $0x24] sm:$0xf]
      %v711 = vld [vmem:[%s7 + $0x28] sm:$0xf]
      %v712 = vld [vmem:[%s7 + $0x2c] sm:$0xf]
      %v713 = vld [vmem:[%s7 + $0x30] sm:$0xf]
      %v714 = vld [vmem:[%s7 + $0x34] sm:$0xf]
      %v715 = vld [vmem:[%s7 + $0x38] sm:$0xf]
      %v716 = vld [vmem:[%s7 + $0x3c] sm:$0xf]
      %v717 = vtanh.pop %v646
      %v718 = vtanh.pop %v647
      %v719 = vpack.c.bf16 %v718, %v717
      %v736 = vunpack.c.l.b16 %v685
      %v737 = vunpack.c.l.b16 %v686
      %v738 = vunpack.c.l.b16 %v687
      %v739 = vunpack.c.l.b16 %v688
      %v740 = vunpack.c.l.b16 %v689
      %v741 = vunpack.c.l.b16 %v690
      %v742 = vunpack.c.l.b16 %v691
      %v743 = vunpack.c.l.b16 %v692
      %v744 = vunpack.c.l.b16 %v693
      %v745 = vunpack.c.l.b16 %v694
      %v746 = vunpack.c.l.b16 %v695
      %v747 = vunpack.c.l.b16 %v696
      %v748 = vunpack.c.l.b16 %v697
      %v749 = vunpack.c.l.b16 %v698
      %v750 = vunpack.c.l.b16 %v699
      %v751 = vunpack.c.l.b16 %v700
      %v752 = vpack.c.b16 %v737, %v736
      %v753 = vpack.c.b16 %v739, %v738
      %v754 = vpack.c.b16 %v741, %v740
      %v755 = vpack.c.b16 %v743, %v742
      %v756 = vpack.c.b16 %v745, %v744
      %v757 = vpack.c.b16 %v747, %v746
      %v758 = vpack.c.b16 %v749, %v748
      %v759 = vpack.c.b16 %v751, %v750
      %768 = vmatprep.subr.bf16.mxu0 0
      %769 = vmatpush1.bf16.msra.mxu0 %v752
      %770 = vmatprep.subr.bf16.mxu0 0
      %771 = vmatpush1.bf16.msra.mxu0 %v753
      %772 = vmatprep.subr.bf16.mxu0 0
      %773 = vmatpush1.bf16.msra.mxu0 %v754
      %774 = vmatprep.subr.bf16.mxu0 0
      %775 = vmatpush1.bf16.msra.mxu0 %v755
      %776 = vmatprep.subr.bf16.mxu0 0
      %777 = vmatpush1.bf16.msra.mxu0 %v756
      %778 = vmatprep.subr.bf16.mxu0 0
      %779 = vmatpush1.bf16.msra.mxu0 %v757
      %780 = vmatprep.subr.bf16.mxu0 0
      %781 = vmatpush1.bf16.msra.mxu0 %v758
      %782 = vmatprep.subr.bf16.mxu0 0
      %783 = vmatpush1.bf16.msra.mxu0 %v759
      %784 = vmatprep.subr.bf16.mxu0 0
      %785 = vmatpush1.bf16.msra.mxu0 0
      %786 = vmatprep.subr.bf16.mxu0 0
      %787 = vmatpush1.bf16.msra.mxu0 0
      %788 = vmatprep.subr.bf16.mxu0 0
      %789 = vmatpush1.bf16.msra.mxu0 0
      %790 = vmatprep.subr.bf16.mxu0 0
      %791 = vmatpush1.bf16.msra.mxu0 0
      %792 = vmatprep.subr.bf16.mxu0 0
      %793 = vmatpush1.bf16.msra.mxu0 0
      %794 = vmatprep.subr.bf16.mxu0 0
      %795 = vmatpush1.bf16.msra.mxu0 0
      %796 = vmatprep.subr.bf16.mxu0 0
      %797 = vmatpush1.bf16.msra.mxu0 0
      %798 = vmatprep.subr.bf16.mxu0 0
      %799 = vmatpush1.bf16.msra.mxu0 0
      %800 = vmatprep.mubr.bf16.mxu0 0
      %801 = vmatmul.mubr.bf16.gmra.mrb[0].mxu0 %v719
      %v802 = vpop.f32.mrb[0].mxu0
      %v803 = vadd.f32 0.0, %v802
      %v804 = vpop.f32.mrb[0].mxu0
      %v805 = vpop.f32.mrb[0].mxu0
      %v806 = vadd.f32 0.0, %v805
      %v807 = vpop.f32.mrb[0].mxu0
      %808 = vdwg.mxu0
      %v809 = vadd.f32 %v648, %v803
      %v810 = vadd.f32 %v649, %v806
      %v811 = vtanh.pop %v809
      %v812 = vtanh.pop %v810
      %v813 = vpack.c.bf16 %v812, %v811
      %814 = vmatprep.subr.bf16.mxu0 0
      %815 = vmatpush1.bf16.msra.mxu0 %v752
      %816 = vmatprep.subr.bf16.mxu0 0
      %817 = vmatpush1.bf16.msra.mxu0 %v753
      %818 = vmatprep.subr.bf16.mxu0 0
      %819 = vmatpush1.bf16.msra.mxu0 %v754
      %820 = vmatprep.subr.bf16.mxu0 0
      %821 = vmatpush1.bf16.msra.mxu0 %v755
      %822 = vmatprep.subr.bf16.mxu0 0
      %823 = vmatpush1.bf16.msra.mxu0 %v756
      %824 = vmatprep.subr.bf16.mxu0 0
      %825 = vmatpush1.bf16.msra.mxu0 %v757
      %826 = vmatprep.subr.bf16.mxu0 0
      %827 = vmatpush1.bf16.msra.mxu0 %v758
      %828 = vmatprep.subr.bf16.mxu0 0
      %829 = vmatpush1.bf16.msra.mxu0 %v759
      %830 = vmatprep.subr.bf16.mxu0 0
      %831 = vmatpush1.bf16.msra.mxu0 0
      %832 = vmatprep.subr.bf16.mxu0 0
      %833 = vmatpush1.bf16.msra.mxu0 0
      %834 = vmatprep.subr.bf16.mxu0 0
      %835 = vmatpush1.bf16.msra.mxu0 0
      %836 = vmatprep.subr.bf16.mxu0 0
      %837 = vmatpush1.bf16.msra.mxu0 0
      %838 = vmatprep.subr.bf16.mxu0 0
      %839 = vmatpush1.bf16.msra.mxu0 0
      %840 = vmatprep.subr.bf16.mxu0 0
      %841 = vmatpush1.bf16.msra.mxu0 0
      %842 = vmatprep.subr.bf16.mxu0 0
      %843 = vmatpush1.bf16.msra.mxu0 0
      %844 = vmatprep.subr.bf16.mxu0 0
      %845 = vmatpush1.bf16.msra.mxu0 0
      %846 = vmatprep.mubr.bf16.mxu0 0
      %847 = vmatmul.mubr.bf16.gmra.mrb[0].mxu0 %v813
      %v848 = vpop.f32.mrb[0].mxu0
      %v849 = vadd.f32 0.0, %v848
      %v850 = vpop.f32.mrb[0].mxu0
      %v851 = vpop.f32.mrb[0].mxu0
      %v852 = vadd.f32 0.0, %v851
      %v853 = vpop.f32.mrb[0].mxu0
      %854 = vdwg.mxu0
      %v855 = vadd.f32 %v650, %v849
      %v856 = vadd.f32 %v651, %v852
      %v857 = vtanh.pop %v855
      %v858 = vtanh.pop %v856
      %v859 = vpack.c.bf16 %v858, %v857
      %860 = vmatprep.subr.bf16.mxu0 0
      %861 = vmatpush1.bf16.msra.mxu0 %v752
      %862 = vmatprep.subr.bf16.mxu0 0
      %863 = vmatpush1.bf16.msra.mxu0 %v753
      %864 = vmatprep.subr.bf16.mxu0 0
      %865 = vmatpush1.bf16.msra.mxu0 %v754
      %866 = vmatprep.subr.bf16.mxu0 0
      %867 = vmatpush1.bf16.msra.mxu0 %v755
      %868 = vmatprep.subr.bf16.mxu0 0
      %869 = vmatpush1.bf16.msra.mxu0 %v756
      %870 = vmatprep.subr.bf16.mxu0 0
      %871 = vmatpush1.bf16.msra.mxu0 %v757
      %872 = vmatprep.subr.bf16.mxu0 0
      %873 = vmatpush1.bf16.msra.mxu0 %v758
      %874 = vmatprep.subr.bf16.mxu0 0
      %875 = vmatpush1.bf16.msra.mxu0 %v759
      %876 = vmatprep.subr.bf16.mxu0 0
      %877 = vmatpush1.bf16.msra.mxu0 0
      %878 = vmatprep.subr.bf16.mxu0 0
      %879 = vmatpush1.bf16.msra.mxu0 0
      %880 = vmatprep.subr.bf16.mxu0 0
      %881 = vmatpush1.bf16.msra.mxu0 0
      %882 = vmatprep.subr.bf16.mxu0 0
      %883 = vmatpush1.bf16.msra.mxu0 0
      %884 = vmatprep.subr.bf16.mxu0 0
      %885 = vmatpush1.bf16.msra.mxu0 0
      %886 = vmatprep.subr.bf16.mxu0 0
      %887 = vmatpush1.bf16.msra.mxu0 0
      %888 = vmatprep.subr.bf16.mxu0 0
      %889 = vmatpush1.bf16.msra.mxu0 0
      %890 = vmatprep.subr.bf16.mxu0 0
      %891 = vmatpush1.bf16.msra.mxu0 0
      %892 = vmatprep.mubr.bf16.mxu0 0
      %893 = vmatmul.mubr.bf16.gmra.mrb[0].mxu0 %v859
      %v894 = vpop.f32.mrb[0].mxu0
      %v895 = vadd.f32 0.0, %v894
      %v896 = vpop.f32.mrb[0].mxu0
      %v897 = vpop.f32.mrb[0].mxu0
      %v898 = vadd.f32 0.0, %v897
      %v899 = vpop.f32.mrb[0].mxu0
      %900 = vdwg.mxu0
      %v901 = vadd.f32 %v652, %v895
      %v902 = vadd.f32 %v653, %v898
      %v903 = vtanh.pop %v901
      %v904 = vtanh.pop %v902
      %v905 = vpack.c.bf16 %v904, %v903
      %906 = vmatprep.subr.bf16.mxu0 0
      %907 = vmatpush1.bf16.msra.mxu0 %v752
      %908 = vmatprep.subr.bf16.mxu0 0
      %909 = vmatpush1.bf16.msra.mxu0 %v753
      %910 = vmatprep.subr.bf16.mxu0 0
      %911 = vmatpush1.bf16.msra.mxu0 %v754
      %912 = vmatprep.subr.bf16.mxu0 0
      %913 = vmatpush1.bf16.msra.mxu0 %v755
      %914 = vmatprep.subr.bf16.mxu0 0
      %915 = vmatpush1.bf16.msra.mxu0 %v756
      %916 = vmatprep.subr.bf16.mxu0 0
      %917 = vmatpush1.bf16.msra.mxu0 %v757
      %918 = vmatprep.subr.bf16.mxu0 0
      %919 = vmatpush1.bf16.msra.mxu0 %v758
      %920 = vmatprep.subr.bf16.mxu0 0
      %921 = vmatpush1.bf16.msra.mxu0 %v759
      %922 = vmatprep.subr.bf16.mxu0 0
      %923 = vmatpush1.bf16.msra.mxu0 0
      %924 = vmatprep.subr.bf16.mxu0 0
      %925 = vmatpush1.bf16.msra.mxu0 0
      %926 = vmatprep.subr.bf16.mxu0 0
      %927 = vmatpush1.bf16.msra.mxu0 0
      %928 = vmatprep.subr.bf16.mxu0 0
      %929 = vmatpush1.bf16.msra.mxu0 0
      %930 = vmatprep.subr.bf16.mxu0 0
      %931 = vmatpush1.bf16.msra.mxu0 0
      %932 = vmatprep.subr.bf16.mxu0 0
      %933 = vmatpush1.bf16.msra.mxu0 0
      %934 = vmatprep.subr.bf16.mxu0 0
      %935 = vmatpush1.bf16.msra.mxu0 0
      %936 = vmatprep.subr.bf16.mxu0 0
      %937 = vmatpush1.bf16.msra.mxu0 0
      %938 = vmatprep.mubr.bf16.mxu0 0
      %939 = vmatmul.mubr.bf16.gmra.mrb[0].mxu0 %v905
      %v940 = vpop.f32.mrb[0].mxu0
      %v941 = vadd.f32 0.0, %v940
      %v942 = vpop.f32.mrb[0].mxu0
      %v943 = vpop.f32.mrb[0].mxu0
      %v944 = vadd.f32 0.0, %v943
      %v945 = vpop.f32.mrb[0].mxu0
      %946 = vdwg.mxu0
      %v947 = vadd.f32 %v654, %v941
      %v948 = vadd.f32 %v655, %v944
      %v949 = vtanh.pop %v947
      %v950 = vtanh.pop %v948
      %v951 = vpack.c.bf16 %v950, %v949
      %952 = vmatprep.subr.bf16.mxu0 0
      %953 = vmatpush1.bf16.msra.mxu0 %v752
      %954 = vmatprep.subr.bf16.mxu0 0
      %955 = vmatpush1.bf16.msra.mxu0 %v753
      %956 = vmatprep.subr.bf16.mxu0 0
      %957 = vmatpush1.bf16.msra.mxu0 %v754
      %958 = vmatprep.subr.bf16.mxu0 0
      %959 = vmatpush1.bf16.msra.mxu0 %v755
      %960 = vmatprep.subr.bf16.mxu0 0
      %961 = vmatpush1.bf16.msra.mxu0 %v756
      %962 = vmatprep.subr.bf16.mxu0 0
      %963 = vmatpush1.bf16.msra.mxu0 %v757
      %964 = vmatprep.subr.bf16.mxu0 0
      %965 = vmatpush1.bf16.msra.mxu0 %v758
      %966 = vmatprep.subr.bf16.mxu0 0
      %967 = vmatpush1.bf16.msra.mxu0 %v759
      %968 = vmatprep.subr.bf16.mxu0 0
      %969 = vmatpush1.bf16.msra.mxu0 0
      %970 = vmatprep.subr.bf16.mxu0 0
      %971 = vmatpush1.bf16.msra.mxu0 0
      %972 = vmatprep.subr.bf16.mxu0 0
      %973 = vmatpush1.bf16.msra.mxu0 0
      %974 = vmatprep.subr.bf16.mxu0 0
      %975 = vmatpush1.bf16.msra.mxu0 0
      %976 = vmatprep.subr.bf16.mxu0 0
      %977 = vmatpush1.bf16.msra.mxu0 0
      %978 = vmatprep.subr.bf16.mxu0 0
      %979 = vmatpush1.bf16.msra.mxu0 0
      %980 = vmatprep.subr.bf16.mxu0 0
      %981 = vmatpush1.bf16.msra.mxu0 0
      %982 = vmatprep.subr.bf16.mxu0 0
      %983 = vmatpush1.bf16.msra.mxu0 0
      %984 = vmatprep.mubr.bf16.mxu0 0
      %985 = vmatmul.mubr.bf16.gmra.mrb[0].mxu0 %v951
      %v986 = vpop.f32.mrb[0].mxu0
      %v987 = vadd.f32 0.0, %v986
      %v988 = vpop.f32.mrb[0].mxu0
      %v989 = vpop.f32.mrb[0].mxu0
      %v990 = vadd.f32 0.0, %v989
      %v991 = vpop.f32.mrb[0].mxu0
      %992 = vdwg.mxu0
      %v993 = vadd.f32 %v656, %v987
      %v994 = vadd.f32 %v657, %v990
      %v995 = vtanh.pop %v993
      %v996 = vtanh.pop %v994
      %v997 = vpack.c.bf16 %v996, %v995
      %998 = vmatprep.subr.bf16.mxu0 0
      %999 = vmatpush1.bf16.msra.mxu0 %v752
      %1000 = vmatprep.subr.bf16.mxu0 0
      %1001 = vmatpush1.bf16.msra.mxu0 %v753
      %1002 = vmatprep.subr.bf16.mxu0 0
      %1003 = vmatpush1.bf16.msra.mxu0 %v754
      %1004 = vmatprep.subr.bf16.mxu0 0
      %1005 = vmatpush1.bf16.msra.mxu0 %v755
      %1006 = vmatprep.subr.bf16.mxu0 0
      %1007 = vmatpush1.bf16.msra.mxu0 %v756
      %1008 = vmatprep.subr.bf16.mxu0 0
      %1009 = vmatpush1.bf16.msra.mxu0 %v757
      %1010 = vmatprep.subr.bf16.mxu0 0
      %1011 = vmatpush1.bf16.msra.mxu0 %v758
      %1012 = vmatprep.subr.bf16.mxu0 0
      %1013 = vmatpush1.bf16.msra.mxu0 %v759
      %1014 = vmatprep.subr.bf16.mxu0 0
      %1015 = vmatpush1.bf16.msra.mxu0 0
      %1016 = vmatprep.subr.bf16.mxu0 0
      %1017 = vmatpush1.bf16.msra.mxu0 0
      %1018 = vmatprep.subr.bf16.mxu0 0
      %1019 = vmatpush1.bf16.msra.mxu0 0
      %1020 = vmatprep.subr.bf16.mxu0 0
      %1021 = vmatpush1.bf16.msra.mxu0 0
      %1022 = vmatprep.subr.bf16.mxu0 0
      %1023 = vmatpush1.bf16.msra.mxu0 0
      %1024 = vmatprep.subr.bf16.mxu0 0
      %1025 = vmatpush1.bf16.msra.mxu0 0
      %1026 = vmatprep.subr.bf16.mxu0 0
      %1027 = vmatpush1.bf16.msra.mxu0 0
      %1028 = vmatprep.subr.bf16.mxu0 0
      %1029 = vmatpush1.bf16.msra.mxu0 0
      %1030 = vmatprep.mubr.bf16.mxu0 0
      %1031 = vmatmul.mubr.bf16.gmra.mrb[0].mxu0 %v997
      %v1032 = vpop.f32.mrb[0].mxu0
      %v1033 = vadd.f32 0.0, %v1032
      %v1034 = vpop.f32.mrb[0].mxu0
      %v1035 = vpop.f32.mrb[0].mxu0
      %v1036 = vadd.f32 0.0, %v1035
      %v1037 = vpop.f32.mrb[0].mxu0
      %1038 = vdwg.mxu0
      %v1039 = vadd.f32 %v658, %v1033
      %v1040 = vadd.f32 %v659, %v1036
      %v1041 = vtanh.pop %v1039
      %v1042 = vtanh.pop %v1040
      %v1043 = vpack.c.bf16 %v1042, %v1041
      %1044 = vmatprep.subr.bf16.mxu0 0
      %1045 = vmatpush1.bf16.msra.mxu0 %v752
      %1046 = vmatprep.subr.bf16.mxu0 0
      %1047 = vmatpush1.bf16.msra.mxu0 %v753
      %1048 = vmatprep.subr.bf16.mxu0 0
      %1049 = vmatpush1.bf16.msra.mxu0 %v754
      %1050 = vmatprep.subr.bf16.mxu0 0
      %1051 = vmatpush1.bf16.msra.mxu0 %v755
      %1052 = vmatprep.subr.bf16.mxu0 0
      %1053 = vmatpush1.bf16.msra.mxu0 %v756
      %1054 = vmatprep.subr.bf16.mxu0 0
      %1055 = vmatpush1.bf16.msra.mxu0 %v757
      %1056 = vmatprep.subr.bf16.mxu0 0
      %1057 = vmatpush1.bf16.msra.mxu0 %v758
      %1058 = vmatprep.subr.bf16.mxu0 0
      %1059 = vmatpush1.bf16.msra.mxu0 %v759
      %1060 = vmatprep.subr.bf16.mxu0 0
      %1061 = vmatpush1.bf16.msra.mxu0 0
      %1062 = vmatprep.subr.bf16.mxu0 0
      %1063 = vmatpush1.bf16.msra.mxu0 0
      %1064 = vmatprep.subr.bf16.mxu0 0
      %1065 = vmatpush1.bf16.msra.mxu0 0
      %1066 = vmatprep.subr.bf16.mxu0 0
      %1067 = vmatpush1.bf16.msra.mxu0 0
      %1068 = vmatprep.subr.bf16.mxu0 0
      %1069 = vmatpush1.bf16.msra.mxu0 0
      %1070 = vmatprep.subr.bf16.mxu0 0
      %1071 = vmatpush1.bf16.msra.mxu0 0
      %1072 = vmatprep.subr.bf16.mxu0 0
      %1073 = vmatpush1.bf16.msra.mxu0 0
      %1074 = vmatprep.subr.bf16.mxu0 0
      %1075 = vmatpush1.bf16.msra.mxu0 0
      %1076 = vmatprep.mubr.bf16.mxu0 0
      %1077 = vmatmul.mubr.bf16.gmra.mrb[0].mxu0 %v1043
      %v1078 = vpop.f32.mrb[0].mxu0
      %v1079 = vadd.f32 0.0, %v1078
      %v1080 = vpop.f32.mrb[0].mxu0
      %v1081 = vpop.f32.mrb[0].mxu0
      %v1082 = vadd.f32 0.0, %v1081
      %v1083 = vpop.f32.mrb[0].mxu0
      %1084 = vdwg.mxu0
      %v1085 = vadd.f32 %v660, %v1079
      %v1086 = vadd.f32 %v661, %v1082
      %v1087 = vtanh.pop %v1085
      %v1088 = vtanh.pop %v1086
      %v1089 = vpack.c.bf16 %v1088, %v1087
      %v1090 = vld [vmem:[%s4] sm:$0xf]
      %v1091 = vld [vmem:[%s4 + $0x4] sm:$0xf]
      %v1092 = vld [vmem:[%s4 + $0x8] sm:$0xf]
      %v1093 = vld [vmem:[%s4 + $0xc] sm:$0xf]
      %v1094 = vld [vmem:[%s4 + $0x10] sm:$0xf]
      %v1095 = vld [vmem:[%s4 + $0x14] sm:$0xf]
      %v1096 = vld [vmem:[%s4 + $0x18] sm:$0xf]
      %v1097 = vld [vmem:[%s4 + $0x1c] sm:$0xf]
      %v1098 = vld [vmem:[%s4 + $0x20] sm:$0xf]
      %v1099 = vld [vmem:[%s4 + $0x24] sm:$0xf]
      %v1100 = vld [vmem:[%s4 + $0x28] sm:$0xf]
      %v1101 = vld [vmem:[%s4 + $0x2c] sm:$0xf]
      %v1102 = vld [vmem:[%s4 + $0x30] sm:$0xf]
      %v1103 = vld [vmem:[%s4 + $0x34] sm:$0xf]
      %v1104 = vld [vmem:[%s4 + $0x38] sm:$0xf]
      %v1105 = vld [vmem:[%s4 + $0x3c] sm:$0xf]
      %v1122 = vunpack.c.l.b16 %v1090
      %v1123 = vunpack.c.l.b16 %v1091
      %v1124 = vunpack.c.l.b16 %v1092
      %v1125 = vunpack.c.l.b16 %v1093
      %v1126 = vunpack.c.l.b16 %v1094
      %v1127 = vunpack.c.l.b16 %v1095
      %v1128 = vunpack.c.l.b16 %v1096
      %v1129 = vunpack.c.l.b16 %v1097
      %v1130 = vunpack.c.l.b16 %v1098
      %v1131 = vunpack.c.l.b16 %v1099
      %v1132 = vunpack.c.l.b16 %v1100
      %v1133 = vunpack.c.l.b16 %v1101
      %v1134 = vunpack.c.l.b16 %v1102
      %v1135 = vunpack.c.l.b16 %v1103
      %v1136 = vunpack.c.l.b16 %v1104
      %v1137 = vunpack.c.l.b16 %v1105
      %v1138 = vpack.c.b16 %v1123, %v1122
      %v1139 = vpack.c.b16 %v1125, %v1124
      %v1140 = vpack.c.b16 %v1127, %v1126
      %v1141 = vpack.c.b16 %v1129, %v1128
      %v1142 = vpack.c.b16 %v1131, %v1130
      %v1143 = vpack.c.b16 %v1133, %v1132
      %v1144 = vpack.c.b16 %v1135, %v1134
      %v1145 = vpack.c.b16 %v1137, %v1136
      %1154 = vmatprep.subr.bf16.mxu0 0
      %1155 = vmatpush1.bf16.msra.mxu0 %v1138
      %1156 = vmatprep.subr.bf16.mxu0 0
      %1157 = vmatpush1.bf16.msra.mxu0 %v1139
      %1158 = vmatprep.subr.bf16.mxu0 0
      %1159 = vmatpush1.bf16.msra.mxu0 %v1140
      %1160 = vmatprep.subr.bf16.mxu0 0
      %1161 = vmatpush1.bf16.msra.mxu0 %v1141
      %1162 = vmatprep.subr.bf16.mxu0 0
      %1163 = vmatpush1.bf16.msra.mxu0 %v1142
      %1164 = vmatprep.subr.bf16.mxu0 0
      %1165 = vmatpush1.bf16.msra.mxu0 %v1143
      %1166 = vmatprep.subr.bf16.mxu0 0
      %1167 = vmatpush1.bf16.msra.mxu0 %v1144
      %1168 = vmatprep.subr.bf16.mxu0 0
      %1169 = vmatpush1.bf16.msra.mxu0 %v1145
      %1170 = vmatprep.subr.bf16.mxu0 0
      %1171 = vmatpush1.bf16.msra.mxu0 0
      %1172 = vmatprep.subr.bf16.mxu0 0
      %1173 = vmatpush1.bf16.msra.mxu0 0
      %1174 = vmatprep.subr.bf16.mxu0 0
      %1175 = vmatpush1.bf16.msra.mxu0 0
      %1176 = vmatprep.subr.bf16.mxu0 0
      %1177 = vmatpush1.bf16.msra.mxu0 0
      %1178 = vmatprep.subr.bf16.mxu0 0
      %1179 = vmatpush1.bf16.msra.mxu0 0
      %1180 = vmatprep.subr.bf16.mxu0 0
      %1181 = vmatpush1.bf16.msra.mxu0 0
      %1182 = vmatprep.subr.bf16.mxu0 0
      %1183 = vmatpush1.bf16.msra.mxu0 0
      %1184 = vmatprep.subr.bf16.mxu0 0
      %1185 = vmatpush1.bf16.msra.mxu0 0
      %1186 = vmatprep.mubr.bf16.mxu0 0
      %1187 = vmatmul.mubr.bf16.gmra.mrb[0].mxu0 %v1089
      %v1188 = vpop.f32.mrb[0].mxu0
      %v1189 = vadd.f32 0.0, %v1188
      %v1190 = vpop.f32.mrb[0].mxu0
      %v1191 = vpop.f32.mrb[0].mxu0
      %v1192 = vadd.f32 0.0, %v1191
      %v1193 = vpop.f32.mrb[0].mxu0
      %1194 = vdwg.mxu0
      %v1195 = vpack.c.bf16 %v1192, %v1189
      %v1196 = vld [vmem:[%s5] sm:$0xf]
      %v1197 = vld [vmem:[%s5 + $0x4] sm:$0xf]
      %v1198 = vld [vmem:[%s5 + $0x8] sm:$0xf]
      %v1199 = vld [vmem:[%s5 + $0xc] sm:$0xf]
      %v1200 = vld [vmem:[%s5 + $0x10] sm:$0xf]
      %v1201 = vld [vmem:[%s5 + $0x14] sm:$0xf]
      %v1202 = vld [vmem:[%s5 + $0x18] sm:$0xf]
      %v1203 = vld [vmem:[%s5 + $0x1c] sm:$0xf]
      %v1204 = vld [vmem:[%s5 + $0x20] sm:$0xf]
      %v1205 = vld [vmem:[%s5 + $0x24] sm:$0xf]
      %v1206 = vld [vmem:[%s5 + $0x28] sm:$0xf]
      %v1207 = vld [vmem:[%s5 + $0x2c] sm:$0xf]
      %v1208 = vld [vmem:[%s5 + $0x30] sm:$0xf]
      %v1209 = vld [vmem:[%s5 + $0x34] sm:$0xf]
      %v1210 = vld [vmem:[%s5 + $0x38] sm:$0xf]
      %v1211 = vld [vmem:[%s5 + $0x3c] sm:$0xf]
      %v1228 = vunpack.c.l.b16 %v1196
      %v1229 = vunpack.c.l.b16 %v1197
      %v1230 = vunpack.c.l.b16 %v1198
      %v1231 = vunpack.c.l.b16 %v1199
      %v1232 = vunpack.c.l.b16 %v1200
      %v1233 = vunpack.c.l.b16 %v1201
      %v1234 = vunpack.c.l.b16 %v1202
      %v1235 = vunpack.c.l.b16 %v1203
      %v1236 = vunpack.c.l.b16 %v1204
      %v1237 = vunpack.c.l.b16 %v1205
      %v1238 = vunpack.c.l.b16 %v1206
      %v1239 = vunpack.c.l.b16 %v1207
      %v1240 = vunpack.c.l.b16 %v1208
      %v1241 = vunpack.c.l.b16 %v1209
      %v1242 = vunpack.c.l.b16 %v1210
      %v1243 = vunpack.c.l.b16 %v1211
      %v1244 = vpack.c.b16 %v1229, %v1228
      %v1245 = vpack.c.b16 %v1231, %v1230
      %v1246 = vpack.c.b16 %v1233, %v1232
      %v1247 = vpack.c.b16 %v1235, %v1234
      %v1248 = vpack.c.b16 %v1237, %v1236
      %v1249 = vpack.c.b16 %v1239, %v1238
      %v1250 = vpack.c.b16 %v1241, %v1240
      %v1251 = vpack.c.b16 %v1243, %v1242
      %1260 = vmatprep.subr.bf16.mxu0 0
      %1261 = vmatpush1.bf16.msra.mxu0 %v1244
      %1262 = vmatprep.subr.bf16.mxu0 0
      %1263 = vmatpush1.bf16.msra.mxu0 %v1245
      %1264 = vmatprep.subr.bf16.mxu0 0
      %1265 = vmatpush1.bf16.msra.mxu0 %v1246
      %1266 = vmatprep.subr.bf16.mxu0 0
      %1267 = vmatpush1.bf16.msra.mxu0 %v1247
      %1268 = vmatprep.subr.bf16.mxu0 0
      %1269 = vmatpush1.bf16.msra.mxu0 %v1248
      %1270 = vmatprep.subr.bf16.mxu0 0
      %1271 = vmatpush1.bf16.msra.mxu0 %v1249
      %1272 = vmatprep.subr.bf16.mxu0 0
      %1273 = vmatpush1.bf16.msra.mxu0 %v1250
      %1274 = vmatprep.subr.bf16.mxu0 0
      %1275 = vmatpush1.bf16.msra.mxu0 %v1251
      %1276 = vmatprep.subr.bf16.mxu0 0
      %1277 = vmatpush1.bf16.msra.mxu0 0
      %1278 = vmatprep.subr.bf16.mxu0 0
      %1279 = vmatpush1.bf16.msra.mxu0 0
      %1280 = vmatprep.subr.bf16.mxu0 0
      %1281 = vmatpush1.bf16.msra.mxu0 0
      %1282 = vmatprep.subr.bf16.mxu0 0
      %1283 = vmatpush1.bf16.msra.mxu0 0
      %1284 = vmatprep.subr.bf16.mxu0 0
      %1285 = vmatpush1.bf16.msra.mxu0 0
      %1286 = vmatprep.subr.bf16.mxu0 0
      %1287 = vmatpush1.bf16.msra.mxu0 0
      %1288 = vmatprep.subr.bf16.mxu0 0
      %1289 = vmatpush1.bf16.msra.mxu0 0
      %1290 = vmatprep.subr.bf16.mxu0 0
      %1291 = vmatpush1.bf16.msra.mxu0 0
      %1292 = vmatprep.mubr.bf16.mxu0 0
      %1293 = vmatmul.mubr.bf16.gmra.mrb[0].mxu0 %v1195
      %v1294 = vpop.f32.mrb[0].mxu0
      %v1295 = vadd.f32 0.0, %v1294
      %v1296 = vpop.f32.mrb[0].mxu0
      %v1297 = vpop.f32.mrb[0].mxu0
      %v1298 = vadd.f32 0.0, %v1297
      %v1299 = vpop.f32.mrb[0].mxu0
      %1300 = vdwg.mxu0
      %v1301 = vtanh.pop %v1295
      %v1302 = vtanh.pop %v1298
      %v1303 = vpack.c.bf16 %v1302, %v1301
      %v1320 = vunpack.c.l.b16 %v701
      %v1321 = vunpack.c.l.b16 %v702
      %v1322 = vunpack.c.l.b16 %v703
      %v1323 = vunpack.c.l.b16 %v704
      %v1324 = vunpack.c.l.b16 %v705
      %v1325 = vunpack.c.l.b16 %v706
      %v1326 = vunpack.c.l.b16 %v707
      %v1327 = vunpack.c.l.b16 %v708
      %v1328 = vunpack.c.l.b16 %v709
      %v1329 = vunpack.c.l.b16 %v710
      %v1330 = vunpack.c.l.b16 %v711
      %v1331 = vunpack.c.l.b16 %v712
      %v1332 = vunpack.c.l.b16 %v713
      %v1333 = vunpack.c.l.b16 %v714
      %v1334 = vunpack.c.l.b16 %v715
      %v1335 = vunpack.c.l.b16 %v716
      %v1336 = vpack.c.b16 %v1321, %v1320
      %v1337 = vpack.c.b16 %v1323, %v1322
      %v1338 = vpack.c.b16 %v1325, %v1324
      %v1339 = vpack.c.b16 %v1327, %v1326
      %v1340 = vpack.c.b16 %v1329, %v1328
      %v1341 = vpack.c.b16 %v1331, %v1330
      %v1342 = vpack.c.b16 %v1333, %v1332
      %v1343 = vpack.c.b16 %v1335, %v1334
      %1352 = vmatprep.subr.bf16.mxu0 0
      %1353 = vmatpush1.bf16.msra.mxu0 %v1336
      %1354 = vmatprep.subr.bf16.mxu0 0
      %1355 = vmatpush1.bf16.msra.mxu0 %v1337
      %1356 = vmatprep.subr.bf16.mxu0 0
      %1357 = vmatpush1.bf16.msra.mxu0 %v1338
      %1358 = vmatprep.subr.bf16.mxu0 0
      %1359 = vmatpush1.bf16.msra.mxu0 %v1339
      %1360 = vmatprep.subr.bf16.mxu0 0
      %1361 = vmatpush1.bf16.msra.mxu0 %v1340
      %1362 = vmatprep.subr.bf16.mxu0 0
      %1363 = vmatpush1.bf16.msra.mxu0 %v1341
      %1364 = vmatprep.subr.bf16.mxu0 0
      %1365 = vmatpush1.bf16.msra.mxu0 %v1342
      %1366 = vmatprep.subr.bf16.mxu0 0
      %1367 = vmatpush1.bf16.msra.mxu0 %v1343
      %1368 = vmatprep.subr.bf16.mxu0 0
      %1369 = vmatpush1.bf16.msra.mxu0 0
      %1370 = vmatprep.subr.bf16.mxu0 0
      %1371 = vmatpush1.bf16.msra.mxu0 0
      %1372 = vmatprep.subr.bf16.mxu0 0
      %1373 = vmatpush1.bf16.msra.mxu0 0
      %1374 = vmatprep.subr.bf16.mxu0 0
      %1375 = vmatpush1.bf16.msra.mxu0 0
      %1376 = vmatprep.subr.bf16.mxu0 0
      %1377 = vmatpush1.bf16.msra.mxu0 0
      %1378 = vmatprep.subr.bf16.mxu0 0
      %1379 = vmatpush1.bf16.msra.mxu0 0
      %1380 = vmatprep.subr.bf16.mxu0 0
      %1381 = vmatpush1.bf16.msra.mxu0 0
      %1382 = vmatprep.subr.bf16.mxu0 0
      %1383 = vmatpush1.bf16.msra.mxu0 0
      %1384 = vmatprep.mubr.bf16.mxu0 0
      %1385 = vmatmul.mubr.bf16.gmra.mrb[0].mxu0 %v1303
      %v1386 = vpop.f32.mrb[0].mxu0
      %v1387 = vadd.f32 0.0, %v1386
      %v1388 = vpop.f32.mrb[0].mxu0
      %v1389 = vpop.f32.mrb[0].mxu0
      %v1390 = vadd.f32 0.0, %v1389
      %v1391 = vpop.f32.mrb[0].mxu0
      %1392 = vdwg.mxu0
      %v1393 = vadd.f32 %v669, %v1387
      %v1394 = vadd.f32 %v670, %v1390
      %v1395 = vtanh.pop %v1393
      %v1396 = vtanh.pop %v1394
      %v1397 = vpack.c.bf16 %v1396, %v1395
      %1398 = vst [vmem:[#allocation2] sm:$0xff] %v1397
      %1399 = vmatprep.subr.bf16.mxu0 0
      %1400 = vmatpush1.bf16.msra.mxu0 %v1336
      %1401 = vmatprep.subr.bf16.mxu0 0
      %1402 = vmatpush1.bf16.msra.mxu0 %v1337
      %1403 = vmatprep.subr.bf16.mxu0 0
      %1404 = vmatpush1.bf16.msra.mxu0 %v1338
      %1405 = vmatprep.subr.bf16.mxu0 0
      %1406 = vmatpush1.bf16.msra.mxu0 %v1339
      %1407 = vmatprep.subr.bf16.mxu0 0
      %1408 = vmatpush1.bf16.msra.mxu0 %v1340
      %1409 = vmatprep.subr.bf16.mxu0 0
      %1410 = vmatpush1.bf16.msra.mxu0 %v1341
      %1411 = vmatprep.subr.bf16.mxu0 0
      %1412 = vmatpush1.bf16.msra.mxu0 %v1342
      %1413 = vmatprep.subr.bf16.mxu0 0
      %1414 = vmatpush1.bf16.msra.mxu0 %v1343
      %1415 = vmatprep.subr.bf16.mxu0 0
      %1416 = vmatpush1.bf16.msra.mxu0 0
      %1417 = vmatprep.subr.bf16.mxu0 0
      %1418 = vmatpush1.bf16.msra.mxu0 0
      %1419 = vmatprep.subr.bf16.mxu0 0
      %1420 = vmatpush1.bf16.msra.mxu0 0
      %1421 = vmatprep.subr.bf16.mxu0 0
      %1422 = vmatpush1.bf16.msra.mxu0 0
      %1423 = vmatprep.subr.bf16.mxu0 0
      %1424 = vmatpush1.bf16.msra.mxu0 0
      %1425 = vmatprep.subr.bf16.mxu0 0
      %1426 = vmatpush1.bf16.msra.mxu0 0
      %1427 = vmatprep.subr.bf16.mxu0 0
      %1428 = vmatpush1.bf16.msra.mxu0 0
      %1429 = vmatprep.subr.bf16.mxu0 0
      %1430 = vmatpush1.bf16.msra.mxu0 0
      %1431 = vmatprep.mubr.bf16.mxu0 0
      %1432 = vmatmul.mubr.bf16.gmra.mrb[0].mxu0 %v1397
      %v1433 = vpop.f32.mrb[0].mxu0
      %v1434 = vadd.f32 0.0, %v1433
      %v1435 = vpop.f32.mrb[0].mxu0
      %v1436 = vpop.f32.mrb[0].mxu0
      %v1437 = vadd.f32 0.0, %v1436
      %v1438 = vpop.f32.mrb[0].mxu0
      %1439 = vdwg.mxu0
      %v1440 = vadd.f32 %v671, %v1434
      %v1441 = vadd.f32 %v672, %v1437
      %v1442 = vtanh.pop %v1440
      %v1443 = vtanh.pop %v1441
      %v1444 = vpack.c.bf16 %v1443, %v1442
      %1445 = vst [vmem:[#allocation2 + $0x8] sm:$0xff] %v1444
      %1446 = vmatprep.subr.bf16.mxu0 0
      %1447 = vmatpush1.bf16.msra.mxu0 %v1336
      %1448 = vmatprep.subr.bf16.mxu0 0
      %1449 = vmatpush1.bf16.msra.mxu0 %v1337
      %1450 = vmatprep.subr.bf16.mxu0 0
      %1451 = vmatpush1.bf16.msra.mxu0 %v1338
      %1452 = vmatprep.subr.bf16.mxu0 0
      %1453 = vmatpush1.bf16.msra.mxu0 %v1339
      %1454 = vmatprep.subr.bf16.mxu0 0
      %1455 = vmatpush1.bf16.msra.mxu0 %v1340
      %1456 = vmatprep.subr.bf16.mxu0 0
      %1457 = vmatpush1.bf16.msra.mxu0 %v1341
      %1458 = vmatprep.subr.bf16.mxu0 0
      %1459 = vmatpush1.bf16.msra.mxu0 %v1342
      %1460 = vmatprep.subr.bf16.mxu0 0
      %1461 = vmatpush1.bf16.msra.mxu0 %v1343
      %1462 = vmatprep.subr.bf16.mxu0 0
      %1463 = vmatpush1.bf16.msra.mxu0 0
      %1464 = vmatprep.subr.bf16.mxu0 0
      %1465 = vmatpush1.bf16.msra.mxu0 0
      %1466 = vmatprep.subr.bf16.mxu0 0
      %1467 = vmatpush1.bf16.msra.mxu0 0
      %1468 = vmatprep.subr.bf16.mxu0 0
      %1469 = vmatpush1.bf16.msra.mxu0 0
      %1470 = vmatprep.subr.bf16.mxu0 0
      %1471 = vmatpush1.bf16.msra.mxu0 0
      %1472 = vmatprep.subr.bf16.mxu0 0
      %1473 = vmatpush1.bf16.msra.mxu0 0
      %1474 = vmatprep.subr.bf16.mxu0 0
      %1475 = vmatpush1.bf16.msra.mxu0 0
      %1476 = vmatprep.subr.bf16.mxu0 0
      %1477 = vmatpush1.bf16.msra.mxu0 0
      %1478 = vmatprep.mubr.bf16.mxu0 0
      %1479 = vmatmul.mubr.bf16.gmra.mrb[0].mxu0 %v1444
      %v1480 = vpop.f32.mrb[0].mxu0
      %v1481 = vadd.f32 0.0, %v1480
      %v1482 = vpop.f32.mrb[0].mxu0
      %v1483 = vpop.f32.mrb[0].mxu0
      %v1484 = vadd.f32 0.0, %v1483
      %v1485 = vpop.f32.mrb[0].mxu0
      %1486 = vdwg.mxu0
      %v1487 = vadd.f32 %v673, %v1481
      %v1488 = vadd.f32 %v674, %v1484
      %v1489 = vtanh.pop %v1487
      %v1490 = vtanh.pop %v1488
      %v1491 = vpack.c.bf16 %v1490, %v1489
      %1492 = vst [vmem:[#allocation2 + $0x10] sm:$0xff] %v1491
      %1493 = vmatprep.subr.bf16.mxu0 0
      %1494 = vmatpush1.bf16.msra.mxu0 %v1336
      %1495 = vmatprep.subr.bf16.mxu0 0
      %1496 = vmatpush1.bf16.msra.mxu0 %v1337
      %1497 = vmatprep.subr.bf16.mxu0 0
      %1498 = vmatpush1.bf16.msra.mxu0 %v1338
      %1499 = vmatprep.subr.bf16.mxu0 0
      %1500 = vmatpush1.bf16.msra.mxu0 %v1339
      %1501 = vmatprep.subr.bf16.mxu0 0
      %1502 = vmatpush1.bf16.msra.mxu0 %v1340
      %1503 = vmatprep.subr.bf16.mxu0 0
      %1504 = vmatpush1.bf16.msra.mxu0 %v1341
      %1505 = vmatprep.subr.bf16.mxu0 0
      %1506 = vmatpush1.bf16.msra.mxu0 %v1342
      %1507 = vmatprep.subr.bf16.mxu0 0
      %1508 = vmatpush1.bf16.msra.mxu0 %v1343
      %1509 = vmatprep.subr.bf16.mxu0 0
      %1510 = vmatpush1.bf16.msra.mxu0 0
      %1511 = vmatprep.subr.bf16.mxu0 0
      %1512 = vmatpush1.bf16.msra.mxu0 0
      %1513 = vmatprep.subr.bf16.mxu0 0
      %1514 = vmatpush1.bf16.msra.mxu0 0
      %1515 = vmatprep.subr.bf16.mxu0 0
      %1516 = vmatpush1.bf16.msra.mxu0 0
      %1517 = vmatprep.subr.bf16.mxu0 0
      %1518 = vmatpush1.bf16.msra.mxu0 0
      %1519 = vmatprep.subr.bf16.mxu0 0
      %1520 = vmatpush1.bf16.msra.mxu0 0
      %1521 = vmatprep.subr.bf16.mxu0 0
      %1522 = vmatpush1.bf16.msra.mxu0 0
      %1523 = vmatprep.subr.bf16.mxu0 0
      %1524 = vmatpush1.bf16.msra.mxu0 0
      %1525 = vmatprep.mubr.bf16.mxu0 0
      %1526 = vmatmul.mubr.bf16.gmra.mrb[0].mxu0 %v1491
      %v1527 = vpop.f32.mrb[0].mxu0
      %v1528 = vadd.f32 0.0, %v1527
      %v1529 = vpop.f32.mrb[0].mxu0
      %v1530 = vpop.f32.mrb[0].mxu0
      %v1531 = vadd.f32 0.0, %v1530
      %v1532 = vpop.f32.mrb[0].mxu0
      %1533 = vdwg.mxu0
      %v1534 = vadd.f32 %v675, %v1528
      %v1535 = vadd.f32 %v676, %v1531
      %v1536 = vtanh.pop %v1534
      %v1537 = vtanh.pop %v1535
      %v1538 = vpack.c.bf16 %v1537, %v1536
      %1539 = vst [vmem:[#allocation2 + $0x18] sm:$0xff] %v1538
      %1540 = vmatprep.subr.bf16.mxu0 0
      %1541 = vmatpush1.bf16.msra.mxu0 %v1336
      %1542 = vmatprep.subr.bf16.mxu0 0
      %1543 = vmatpush1.bf16.msra.mxu0 %v1337
      %1544 = vmatprep.subr.bf16.mxu0 0
      %1545 = vmatpush1.bf16.msra.mxu0 %v1338
      %1546 = vmatprep.subr.bf16.mxu0 0
      %1547 = vmatpush1.bf16.msra.mxu0 %v1339
      %1548 = vmatprep.subr.bf16.mxu0 0
      %1549 = vmatpush1.bf16.msra.mxu0 %v1340
      %1550 = vmatprep.subr.bf16.mxu0 0
      %1551 = vmatpush1.bf16.msra.mxu0 %v1341
      %1552 = vmatprep.subr.bf16.mxu0 0
      %1553 = vmatpush1.bf16.msra.mxu0 %v1342
      %1554 = vmatprep.subr.bf16.mxu0 0
      %1555 = vmatpush1.bf16.msra.mxu0 %v1343
      %1556 = vmatprep.subr.bf16.mxu0 0
      %1557 = vmatpush1.bf16.msra.mxu0 0
      %1558 = vmatprep.subr.bf16.mxu0 0
      %1559 = vmatpush1.bf16.msra.mxu0 0
      %1560 = vmatprep.subr.bf16.mxu0 0
      %1561 = vmatpush1.bf16.msra.mxu0 0
      %1562 = vmatprep.subr.bf16.mxu0 0
      %1563 = vmatpush1.bf16.msra.mxu0 0
      %1564 = vmatprep.subr.bf16.mxu0 0
      %1565 = vmatpush1.bf16.msra.mxu0 0
      %1566 = vmatprep.subr.bf16.mxu0 0
      %1567 = vmatpush1.bf16.msra.mxu0 0
      %1568 = vmatprep.subr.bf16.mxu0 0
      %1569 = vmatpush1.bf16.msra.mxu0 0
      %1570 = vmatprep.subr.bf16.mxu0 0
      %1571 = vmatpush1.bf16.msra.mxu0 0
      %1572 = vmatprep.mubr.bf16.mxu0 0
      %1573 = vmatmul.mubr.bf16.gmra.mrb[0].mxu0 %v1538
      %v1574 = vpop.f32.mrb[0].mxu0
      %v1575 = vadd.f32 0.0, %v1574
      %v1576 = vpop.f32.mrb[0].mxu0
      %v1577 = vpop.f32.mrb[0].mxu0
      %v1578 = vadd.f32 0.0, %v1577
      %v1579 = vpop.f32.mrb[0].mxu0
      %1580 = vdwg.mxu0
      %v1581 = vadd.f32 %v677, %v1575
      %v1582 = vadd.f32 %v678, %v1578
      %v1583 = vtanh.pop %v1581
      %v1584 = vtanh.pop %v1582
      %v1585 = vpack.c.bf16 %v1584, %v1583
      %1586 = vst [vmem:[#allocation2 + $0x20] sm:$0xff] %v1585
      %1587 = vmatprep.subr.bf16.mxu0 0
      %1588 = vmatpush1.bf16.msra.mxu0 %v1336
      %1589 = vmatprep.subr.bf16.mxu0 0
      %1590 = vmatpush1.bf16.msra.mxu0 %v1337
      %1591 = vmatprep.subr.bf16.mxu0 0
      %1592 = vmatpush1.bf16.msra.mxu0 %v1338
      %1593 = vmatprep.subr.bf16.mxu0 0
      %1594 = vmatpush1.bf16.msra.mxu0 %v1339
      %1595 = vmatprep.subr.bf16.mxu0 0
      %1596 = vmatpush1.bf16.msra.mxu0 %v1340
      %1597 = vmatprep.subr.bf16.mxu0 0
      %1598 = vmatpush1.bf16.msra.mxu0 %v1341
      %1599 = vmatprep.subr.bf16.mxu0 0
      %1600 = vmatpush1.bf16.msra.mxu0 %v1342
      %1601 = vmatprep.subr.bf16.mxu0 0
      %1602 = vmatpush1.bf16.msra.mxu0 %v1343
      %1603 = vmatprep.subr.bf16.mxu0 0
      %1604 = vmatpush1.bf16.msra.mxu0 0
      %1605 = vmatprep.subr.bf16.mxu0 0
      %1606 = vmatpush1.bf16.msra.mxu0 0
      %1607 = vmatprep.subr.bf16.mxu0 0
      %1608 = vmatpush1.bf16.msra.mxu0 0
      %1609 = vmatprep.subr.bf16.mxu0 0
      %1610 = vmatpush1.bf16.msra.mxu0 0
      %1611 = vmatprep.subr.bf16.mxu0 0
      %1612 = vmatpush1.bf16.msra.mxu0 0
      %1613 = vmatprep.subr.bf16.mxu0 0
      %1614 = vmatpush1.bf16.msra.mxu0 0
      %1615 = vmatprep.subr.bf16.mxu0 0
      %1616 = vmatpush1.bf16.msra.mxu0 0
      %1617 = vmatprep.subr.bf16.mxu0 0
      %1618 = vmatpush1.bf16.msra.mxu0 0
      %1619 = vmatprep.mubr.bf16.mxu0 0
      %1620 = vmatmul.mubr.bf16.gmra.mrb[0].mxu0 %v1585
      %v1621 = vpop.f32.mrb[0].mxu0
      %v1622 = vadd.f32 0.0, %v1621
      %v1623 = vpop.f32.mrb[0].mxu0
      %v1624 = vpop.f32.mrb[0].mxu0
      %v1625 = vadd.f32 0.0, %v1624
      %v1626 = vpop.f32.mrb[0].mxu0
      %1627 = vdwg.mxu0
      %v1628 = vadd.f32 %v679, %v1622
      %v1629 = vadd.f32 %v680, %v1625
      %v1630 = vtanh.pop %v1628
      %v1631 = vtanh.pop %v1629
      %v1632 = vpack.c.bf16 %v1631, %v1630
      %1633 = vst [vmem:[#allocation2 + $0x28] sm:$0xff] %v1632
      %1634 = vmatprep.subr.bf16.mxu0 0
      %1635 = vmatpush1.bf16.msra.mxu0 %v1336
      %1636 = vmatprep.subr.bf16.mxu0 0
      %1637 = vmatpush1.bf16.msra.mxu0 %v1337
      %1638 = vmatprep.subr.bf16.mxu0 0
      %1639 = vmatpush1.bf16.msra.mxu0 %v1338
      %1640 = vmatprep.subr.bf16.mxu0 0
      %1641 = vmatpush1.bf16.msra.mxu0 %v1339
      %1642 = vmatprep.subr.bf16.mxu0 0
      %1643 = vmatpush1.bf16.msra.mxu0 %v1340
      %1644 = vmatprep.subr.bf16.mxu0 0
      %1645 = vmatpush1.bf16.msra.mxu0 %v1341
      %1646 = vmatprep.subr.bf16.mxu0 0
      %1647 = vmatpush1.bf16.msra.mxu0 %v1342
      %1648 = vmatprep.subr.bf16.mxu0 0
      %1649 = vmatpush1.bf16.msra.mxu0 %v1343
      %1650 = vmatprep.subr.bf16.mxu0 0
      %1651 = vmatpush1.bf16.msra.mxu0 0
      %1652 = vmatprep.subr.bf16.mxu0 0
      %1653 = vmatpush1.bf16.msra.mxu0 0
      %1654 = vmatprep.subr.bf16.mxu0 0
      %1655 = vmatpush1.bf16.msra.mxu0 0
      %1656 = vmatprep.subr.bf16.mxu0 0
      %1657 = vmatpush1.bf16.msra.mxu0 0
      %1658 = vmatprep.subr.bf16.mxu0 0
      %1659 = vmatpush1.bf16.msra.mxu0 0
      %1660 = vmatprep.subr.bf16.mxu0 0
      %1661 = vmatpush1.bf16.msra.mxu0 0
      %1662 = vmatprep.subr.bf16.mxu0 0
      %1663 = vmatpush1.bf16.msra.mxu0 0
      %1664 = vmatprep.subr.bf16.mxu0 0
      %1665 = vmatpush1.bf16.msra.mxu0 0
      %1666 = vmatprep.mubr.bf16.mxu0 0
      %1667 = vmatmul.mubr.bf16.gmra.mrb[0].mxu0 %v1632
      %v1668 = vpop.f32.mrb[0].mxu0
      %v1669 = vadd.f32 0.0, %v1668
      %v1670 = vpop.f32.mrb[0].mxu0
      %v1671 = vpop.f32.mrb[0].mxu0
      %v1672 = vadd.f32 0.0, %v1671
      %v1673 = vpop.f32.mrb[0].mxu0
      %1674 = vdwg.mxu0
      %v1675 = vadd.f32 %v681, %v1669
      %v1676 = vadd.f32 %v682, %v1672
      %v1677 = vtanh.pop %v1675
      %v1678 = vtanh.pop %v1676
      %v1679 = vpack.c.bf16 %v1678, %v1677
      %1680 = vst [vmem:[#allocation2 + $0x30] sm:$0xff] %v1679
      %1681 = vmatprep.subr.bf16.mxu0 0
      %1682 = vmatpush1.bf16.msra.mxu0 %v1336
      %1683 = vmatprep.subr.bf16.mxu0 0
      %1684 = vmatpush1.bf16.msra.mxu0 %v1337
      %1685 = vmatprep.subr.bf16.mxu0 0
      %1686 = vmatpush1.bf16.msra.mxu0 %v1338
      %1687 = vmatprep.subr.bf16.mxu0 0
      %1688 = vmatpush1.bf16.msra.mxu0 %v1339
      %1689 = vmatprep.subr.bf16.mxu0 0
      %1690 = vmatpush1.bf16.msra.mxu0 %v1340
      %1691 = vmatprep.subr.bf16.mxu0 0
      %1692 = vmatpush1.bf16.msra.mxu0 %v1341
      %1693 = vmatprep.subr.bf16.mxu0 0
      %1694 = vmatpush1.bf16.msra.mxu0 %v1342
      %1695 = vmatprep.subr.bf16.mxu0 0
      %1696 = vmatpush1.bf16.msra.mxu0 %v1343
      %1697 = vmatprep.subr.bf16.mxu0 0
      %1698 = vmatpush1.bf16.msra.mxu0 0
      %1699 = vmatprep.subr.bf16.mxu0 0
      %1700 = vmatpush1.bf16.msra.mxu0 0
      %1701 = vmatprep.subr.bf16.mxu0 0
      %1702 = vmatpush1.bf16.msra.mxu0 0
      %1703 = vmatprep.subr.bf16.mxu0 0
      %1704 = vmatpush1.bf16.msra.mxu0 0
      %1705 = vmatprep.subr.bf16.mxu0 0
      %1706 = vmatpush1.bf16.msra.mxu0 0
      %1707 = vmatprep.subr.bf16.mxu0 0
      %1708 = vmatpush1.bf16.msra.mxu0 0
      %1709 = vmatprep.subr.bf16.mxu0 0
      %1710 = vmatpush1.bf16.msra.mxu0 0
      %1711 = vmatprep.subr.bf16.mxu0 0
      %1712 = vmatpush1.bf16.msra.mxu0 0
      %1713 = vmatprep.mubr.bf16.mxu0 0
      %1714 = vmatmul.mubr.bf16.gmra.mrb[0].mxu0 %v1679
      %v1715 = vpop.f32.mrb[0].mxu0
      %v1716 = vadd.f32 0.0, %v1715
      %v1717 = vpop.f32.mrb[0].mxu0
      %v1718 = vpop.f32.mrb[0].mxu0
      %v1719 = vadd.f32 0.0, %v1718
      %v1720 = vpop.f32.mrb[0].mxu0
      %1721 = vdwg.mxu0
      %v1722 = vadd.f32 %v683, %v1716
      %v1723 = vadd.f32 %v684, %v1719
      %v1724 = vtanh.pop %v1722
      %v1725 = vtanh.pop %v1723
      %v1726 = vpack.c.bf16 %v1725, %v1724
      %1727 = vst [vmem:[#allocation2 + $0x38] sm:$0xff] %v1726
      %v1728 = vld [vmem:[#allocation2] sm:$0xff]
      %v1729 = vld [vmem:[#allocation2 + $0x8] sm:$0xff]
      %v1730 = vld [vmem:[#allocation2 + $0x10] sm:$0xff]
      %v1731 = vld [vmem:[#allocation2 + $0x18] sm:$0xff]
      %v1732 = vld [vmem:[#allocation2 + $0x20] sm:$0xff]
      %v1733 = vld [vmem:[#allocation2 + $0x28] sm:$0xff]
      %v1734 = vld [vmem:[#allocation2 + $0x30] sm:$0xff]
      %v1735 = vld [vmem:[#allocation2 + $0x38] sm:$0xff]
      %v1736 = vld [vmem:[%s8] sm:$0xff]
      %v1737 = vld [vmem:[%s8 + $0x8] sm:$0xff]
      %v1738 = vld [vmem:[%s8 + $0x10] sm:$0xff]
      %v1739 = vld [vmem:[%s8 + $0x18] sm:$0xff]
      %v1740 = vld [vmem:[%s8 + $0x20] sm:$0xff]
      %v1741 = vld [vmem:[%s8 + $0x28] sm:$0xff]
      %v1742 = vld [vmem:[%s8 + $0x30] sm:$0xff]
      %v1743 = vld [vmem:[%s8 + $0x38] sm:$0xff]
      %v1744 = vld [vmem:[%s8 + $0x40] sm:$0xff]
      %v1745 = vld [vmem:[%s8 + $0x48] sm:$0xff]
      %v1746 = vld [vmem:[%s8 + $0x50] sm:$0xff]
      %v1747 = vld [vmem:[%s8 + $0x58] sm:$0xff]
      %v1748 = vld [vmem:[%s8 + $0x60] sm:$0xff]
      %v1749 = vld [vmem:[%s8 + $0x68] sm:$0xff]
      %v1750 = vld [vmem:[%s8 + $0x70] sm:$0xff]
      %v1751 = vld [vmem:[%s8 + $0x78] sm:$0xff]
      %v1752 = vld [vmem:[%s9] sm:$0x3]
      %v1754 = vlaneseq
      %v1755 = vshrl.u32 %v1754, 7
      %v1756 = vsub.s32 0, %v1755
      %v1757 = vrot.slane %v1752, %v1756
      %v1758 = vlaneseq
      %v1759 = vshrl.u32 %v1758, 7
      %v1760 = vsub.s32 1, %v1759
      %v1761 = vrot.slane %v1752, %v1760
      %v1780 = vunpack.c.l.b16 %v1736
      %v1781 = vunpack.c.h.b16 %v1736
      %v1782 = vunpack.c.l.b16 %v1737
      %v1783 = vunpack.c.h.b16 %v1737
      %v1784 = vunpack.c.l.b16 %v1738
      %v1785 = vunpack.c.h.b16 %v1738
      %v1786 = vunpack.c.l.b16 %v1739
      %v1787 = vunpack.c.h.b16 %v1739
      %v1788 = vunpack.c.l.b16 %v1740
      %v1789 = vunpack.c.h.b16 %v1740
      %v1790 = vunpack.c.l.b16 %v1741
      %v1791 = vunpack.c.h.b16 %v1741
      %v1792 = vunpack.c.l.b16 %v1742
      %v1793 = vunpack.c.h.b16 %v1742
      %v1794 = vunpack.c.l.b16 %v1743
      %v1795 = vunpack.c.h.b16 %v1743
      %v1796 = vunpack.c.l.b16 %v1744
      %v1797 = vunpack.c.h.b16 %v1744
      %v1798 = vunpack.c.l.b16 %v1745
      %v1799 = vunpack.c.h.b16 %v1745
      %v1800 = vunpack.c.l.b16 %v1746
      %v1801 = vunpack.c.h.b16 %v1746
      %v1802 = vunpack.c.l.b16 %v1747
      %v1803 = vunpack.c.h.b16 %v1747
      %v1804 = vunpack.c.l.b16 %v1748
      %v1805 = vunpack.c.h.b16 %v1748
      %v1806 = vunpack.c.l.b16 %v1749
      %v1807 = vunpack.c.h.b16 %v1749
      %v1808 = vunpack.c.l.b16 %v1750
      %v1809 = vunpack.c.h.b16 %v1750
      %v1810 = vunpack.c.l.b16 %v1751
      %v1811 = vunpack.c.h.b16 %v1751
      %v1812 = vpack.c.b16 %v1782, %v1780
      %v1813 = vpack.c.b16 %v1783, %v1781
      %v1814 = vpack.c.b16 %v1786, %v1784
      %v1815 = vpack.c.b16 %v1787, %v1785
      %v1816 = vpack.c.b16 %v1790, %v1788
      %v1817 = vpack.c.b16 %v1791, %v1789
      %v1818 = vpack.c.b16 %v1794, %v1792
      %v1819 = vpack.c.b16 %v1795, %v1793
      %v1820 = vpack.c.b16 %v1798, %v1796
      %v1821 = vpack.c.b16 %v1799, %v1797
      %v1822 = vpack.c.b16 %v1802, %v1800
      %v1823 = vpack.c.b16 %v1803, %v1801
      %v1824 = vpack.c.b16 %v1806, %v1804
      %v1825 = vpack.c.b16 %v1807, %v1805
      %v1826 = vpack.c.b16 %v1810, %v1808
      %v1827 = vpack.c.b16 %v1811, %v1809
      %1844 = vmatprep.subr.bf16.mxu0 %v1813
      %1845 = vmatpush1.bf16.msra.mxu0 %v1812
      %1846 = vmatprep.subr.bf16.mxu0 %v1815
      %1847 = vmatpush1.bf16.msra.mxu0 %v1814
      %1848 = vmatprep.subr.bf16.mxu0 %v1817
      %1849 = vmatpush1.bf16.msra.mxu0 %v1816
      %1850 = vmatprep.subr.bf16.mxu0 %v1819
      %1851 = vmatpush1.bf16.msra.mxu0 %v1818
      %1852 = vmatprep.subr.bf16.mxu0 %v1821
      %1853 = vmatpush1.bf16.msra.mxu0 %v1820
      %1854 = vmatprep.subr.bf16.mxu0 %v1823
      %1855 = vmatpush1.bf16.msra.mxu0 %v1822
      %1856 = vmatprep.subr.bf16.mxu0 %v1825
      %1857 = vmatpush1.bf16.msra.mxu0 %v1824
      %1858 = vmatprep.subr.bf16.mxu0 %v1827
      %1859 = vmatpush1.bf16.msra.mxu0 %v1826
      %1860 = vmatprep.subr.bf16.mxu0 0
      %1861 = vmatpush1.bf16.msra.mxu0 0
      %1862 = vmatprep.subr.bf16.mxu0 0
      %1863 = vmatpush1.bf16.msra.mxu0 0
      %1864 = vmatprep.subr.bf16.mxu0 0
      %1865 = vmatpush1.bf16.msra.mxu0 0
      %1866 = vmatprep.subr.bf16.mxu0 0
      %1867 = vmatpush1.bf16.msra.mxu0 0
      %1868 = vmatprep.subr.bf16.mxu0 0
      %1869 = vmatpush1.bf16.msra.mxu0 0
      %1870 = vmatprep.subr.bf16.mxu0 0
      %1871 = vmatpush1.bf16.msra.mxu0 0
      %1872 = vmatprep.subr.bf16.mxu0 0
      %1873 = vmatpush1.bf16.msra.mxu0 0
      %1874 = vmatprep.subr.bf16.mxu0 0
      %1875 = vmatpush1.bf16.msra.mxu0 0
      %1876 = vmatprep.mubr.bf16.mxu0 0
      %1877 = vmatmul.mubr.bf16.gmra.mrb[0].mxu0 %v1728
      %v1878 = vpop.f32.mrb[0].mxu0
      %v1879 = vadd.f32 %v1757, %v1878
      %v1880 = vpop.f32.mrb[0].mxu0
      %v1881 = vadd.f32 %v1761, %v1880
      %v1882 = vpop.f32.mrb[0].mxu0
      %v1883 = vadd.f32 %v1757, %v1882
      %v1884 = vpop.f32.mrb[0].mxu0
      %v1885 = vadd.f32 %v1761, %v1884
      %1886 = vmatprep.mubr.bf16.mxu0 0
      %1887 = vmatmul.mubr.bf16.gmra.mrb[0].mxu0 %v1729
      %v1888 = vpop.f32.mrb[0].mxu0
      %v1889 = vadd.f32 %v1757, %v1888
      %v1890 = vpop.f32.mrb[0].mxu0
      %v1891 = vadd.f32 %v1761, %v1890
      %v1892 = vpop.f32.mrb[0].mxu0
      %v1893 = vadd.f32 %v1757, %v1892
      %v1894 = vpop.f32.mrb[0].mxu0
      %v1895 = vadd.f32 %v1761, %v1894
      %1896 = vmatprep.mubr.bf16.mxu0 0
      %1897 = vmatmul.mubr.bf16.gmra.mrb[0].mxu0 %v1730
      %v1898 = vpop.f32.mrb[0].mxu0
      %v1899 = vadd.f32 %v1757, %v1898
      %v1900 = vpop.f32.mrb[0].mxu0
      %v1901 = vadd.f32 %v1761, %v1900
      %v1902 = vpop.f32.mrb[0].mxu0
      %v1903 = vadd.f32 %v1757, %v1902
      %v1904 = vpop.f32.mrb[0].mxu0
      %v1905 = vadd.f32 %v1761, %v1904
      %1906 = vmatprep.mubr.bf16.mxu0 0
      %1907 = vmatmul.mubr.bf16.gmra.mrb[0].mxu0 %v1731
      %v1908 = vpop.f32.mrb[0].mxu0
      %v1909 = vadd.f32 %v1757, %v1908
      %v1910 = vpop.f32.mrb[0].mxu0
      %v1911 = vadd.f32 %v1761, %v1910
      %v1912 = vpop.f32.mrb[0].mxu0
      %v1913 = vadd.f32 %v1757, %v1912
      %v1914 = vpop.f32.mrb[0].mxu0
      %v1915 = vadd.f32 %v1761, %v1914
      %1916 = vmatprep.mubr.bf16.mxu0 0
      %1917 = vmatmul.mubr.bf16.gmra.mrb[0].mxu0 %v1732
      %v1918 = vpop.f32.mrb[0].mxu0
      %v1919 = vadd.f32 %v1757, %v1918
      %v1920 = vpop.f32.mrb[0].mxu0
      %v1921 = vadd.f32 %v1761, %v1920
      %v1922 = vpop.f32.mrb[0].mxu0
      %v1923 = vadd.f32 %v1757, %v1922
      %v1924 = vpop.f32.mrb[0].mxu0
      %v1925 = vadd.f32 %v1761, %v1924
      %1926 = vmatprep.mubr.bf16.mxu0 0
      %1927 = vmatmul.mubr.bf16.gmra.mrb[0].mxu0 %v1733
      %v1928 = vpop.f32.mrb[0].mxu0
      %v1929 = vadd.f32 %v1757, %v1928
      %v1930 = vpop.f32.mrb[0].mxu0
      %v1931 = vadd.f32 %v1761, %v1930
      %v1932 = vpop.f32.mrb[0].mxu0
      %v1933 = vadd.f32 %v1757, %v1932
      %v1934 = vpop.f32.mrb[0].mxu0
      %v1935 = vadd.f32 %v1761, %v1934
      %1936 = vmatprep.mubr.bf16.mxu0 0
      %1937 = vmatmul.mubr.bf16.gmra.mrb[0].mxu0 %v1734
      %v1938 = vpop.f32.mrb[0].mxu0
      %v1939 = vadd.f32 %v1757, %v1938
      %v1940 = vpop.f32.mrb[0].mxu0
      %v1941 = vadd.f32 %v1761, %v1940
      %v1942 = vpop.f32.mrb[0].mxu0
      %v1943 = vadd.f32 %v1757, %v1942
      %v1944 = vpop.f32.mrb[0].mxu0
      %v1945 = vadd.f32 %v1761, %v1944
      %1946 = vmatprep.mubr.bf16.mxu0 0
      %1947 = vmatmul.mubr.bf16.gmra.mrb[0].mxu0 %v1735
      %v1948 = vpop.f32.mrb[0].mxu0
      %v1949 = vadd.f32 %v1757, %v1948
      %v1950 = vpop.f32.mrb[0].mxu0
      %v1951 = vadd.f32 %v1761, %v1950
      %v1952 = vpop.f32.mrb[0].mxu0
      %v1953 = vadd.f32 %v1757, %v1952
      %v1954 = vpop.f32.mrb[0].mxu0
      %v1955 = vadd.f32 %v1761, %v1954
      %1956 = vdwg.mxu0
      %1957 = vst [vmem:[%s363] sm:$0xff] %v1879
      %1958 = vst [vmem:[%s363 + $0x8] sm:$0xff] %v1881
      %1959 = vst [vmem:[%s363 + $0x10] sm:$0xff] %v1883
      %1960 = vst [vmem:[%s363 + $0x18] sm:$0xff] %v1885
      %1961 = vst [vmem:[%s363 + $0x20] sm:$0xff] %v1889
      %1962 = vst [vmem:[%s363 + $0x28] sm:$0xff] %v1891
      %1963 = vst [vmem:[%s363 + $0x30] sm:$0xff] %v1893
      %1964 = vst [vmem:[%s363 + $0x38] sm:$0xff] %v1895
      %1965 = vst [vmem:[%s363 + $0x40] sm:$0xff] %v1899
      %1966 = vst [vmem:[%s363 + $0x48] sm:$0xff] %v1901
      %1967 = vst [vmem:[%s363 + $0x50] sm:$0xff] %v1903
      %1968 = vst [vmem:[%s363 + $0x58] sm:$0xff] %v1905
      %1969 = vst [vmem:[%s363 + $0x60] sm:$0xff] %v1909
      %1970 = vst [vmem:[%s363 + $0x68] sm:$0xff] %v1911
      %1971 = vst [vmem:[%s363 + $0x70] sm:$0xff] %v1913
      %1972 = vst [vmem:[%s363 + $0x78] sm:$0xff] %v1915
      %1973 = vst [vmem:[%s363 + $0x80] sm:$0xff] %v1919
      %1974 = vst [vmem:[%s363 + $0x88] sm:$0xff] %v1921
      %1975 = vst [vmem:[%s363 + $0x90] sm:$0xff] %v1923
      %1976 = vst [vmem:[%s363 + $0x98] sm:$0xff] %v1925
      %1977 = vst [vmem:[%s363 + $0xa0] sm:$0xff] %v1929
      %1978 = vst [vmem:[%s363 + $0xa8] sm:$0xff] %v1931
      %1979 = vst [vmem:[%s363 + $0xb0] sm:$0xff] %v1933
      %1980 = vst [vmem:[%s363 + $0xb8] sm:$0xff] %v1935
      %1981 = vst [vmem:[%s363 + $0xc0] sm:$0xff] %v1939
      %1982 = vst [vmem:[%s363 + $0xc8] sm:$0xff] %v1941
      %1983 = vst [vmem:[%s363 + $0xd0] sm:$0xff] %v1943
      %1984 = vst [vmem:[%s363 + $0xd8] sm:$0xff] %v1945
      %1985 = vst [vmem:[%s363 + $0xe0] sm:$0xff] %v1949
      %1986 = vst [vmem:[%s363 + $0xe8] sm:$0xff] %v1951
      %1987 = vst [vmem:[%s363 + $0xf0] sm:$0xff] %v1953
      %1988 = vst [vmem:[%s363 + $0xf8] sm:$0xff] %v1955
      %s1989 = smul.u32 16, %s21
      %p1990 = scmp.lt.s32.totalorder %s1989, 31
      %s1991 = scalar_select %p1990, %s1989, 31
      %s1992 = smul.addr %s1991, 2
      %s1993 = smul.addr %s1992, 8
      %s1994 = scalar_lea.vmem %s10, %s1993
      // Predicated region
      $region61: #{autoencoder_rnn_forward.1} parent=59 // pred_check
        %p1995 = pneg %p254
      $region62: #{autoencoder_rnn_forward.1} parent=59 // pred_check_branch
        %1997 = sbr.rel (%p1995) target = $region64
      $region63: #{autoencoder_rnn_forward.1} parent=59 // pred_region
        %s1998 = smul.u32 16, %s21
      $region64: #{autoencoder_rnn_forward.1} parent=59 // pred_fallthru
        _
    $region60: #{autoencoder_rnn_forward.1} parent=5 // pred_fallthru
      _
    %p1999 = scmp.le.s32.totalorder 2, %s16
    // Predicated region
    $region65: #{autoencoder_rnn_forward.1} parent=5 // pred_check
      %p2000 = pneg %p1999
    $region66: #{autoencoder_rnn_forward.1} parent=5 // pred_check_branch
      %2002 = sbr.rel (%p2000) target = $region68
    $region67: #{autoencoder_rnn_forward.1} parent=5 // pred_region
      %s2003 = ssub.s32 %s16, 2
      // Predicated region
      $region69: #{autoencoder_rnn_forward.1} parent=67 // pred_check
        %p2004 = pneg %p260
      $region70: #{autoencoder_rnn_forward.1} parent=67 // pred_check_branch
        %2006 = sbr.rel (%p2004) target = $region72
      $region71: #{autoencoder_rnn_forward.1} parent=67 // pred_region
        %s2007 = smul.u32 16, %s22
        %p2008 = scmp.lt.s32.totalorder %s2007, 31
        %s2009 = scalar_select %p2008, %s2007, 31
        %s2010 = smul.addr %s2009, 2
        %s2011 = smul.addr %s2010, 8
        %s2012 = scalar_lea.vmem %s10, %s2011
      $region72: #{autoencoder_rnn_forward.1} parent=67 // pred_fallthru
        _
    $region68: #{autoencoder_rnn_forward.1} parent=5 // pred_fallthru
      _
  $region6: #{autoencoder_rnn_forward.1} parent=0 // loop_footer
    %s20 = sadd.s32 1, %s16
  $region7: #{autoencoder_rnn_forward.1} parent=0 // loop_footer_branch
    %15 = sbr.rel target = $region3
  $region8: #{autoencoder_rnn_forward.1} parent=0 // loop_exit
    _

</llo_original>
